<compile_context>
chip_gen: v5e
topology: v5e:2x2
jax: 0.10.0
libtpu: 0.0.40
codegen_flags: <defaults>
</compile_context>

<pallas_src>
import functools

import jax
import jax.numpy as jnp
from jax import lax
from jax.experimental import pallas as pl
from jax.experimental.pallas import tpu as pltpu


def _round_up(x, m):
    return ((x + m - 1) // m) * m


def _apply_activ(y, alpha, activ):
    """Elementwise activation on an (tm, tn) f32 tile. alpha: (1, tn) or None."""
    if activ is None:
        return y
    if activ == "relu":
        return jnp.maximum(y, 0.0)
    if activ == "relu6":
        return jnp.clip(y, 0.0, 6.0)
    if activ == "prelu":
        return jnp.where(y > 0, y, y * alpha)
    if activ.startswith("lrelu"):
        leak = float(activ.split("_")[1])
        return jnp.where(y > 0, y, y * leak)
    if activ == "hardswish":
        return y * jnp.clip(y + 3.0, 0.0, 6.0) * (1.0 / 6.0)
    raise ValueError(f"unsupported activation: {activ}")


def conv_unit_kernel(*refs, activ, has_add):
    """Tiled matmul + fused BN/residual/activation epilogue.

    refs (in order):
      patch_ref (tm, tk) bf16   im2col'd input tile
      w_ref     (tk, tn) bf16   flattened conv weight tile
      scale_ref (1, tn)  f32    folded BN scale
      bias_ref  (1, tn)  f32    folded BN bias (+ conv bias)
      [alpha_ref (1, tn) f32]   only if activ == 'prelu'
      [add_ref  (tm, tn) f32]   only if residual is given
      out_ref   (tm, tn) f32
      acc_ref   (tm, tn) f32    VMEM scratch accumulator
    """
    patch_ref, w_ref, scale_ref, bias_ref = refs[:4]
    idx = 4
    alpha_ref = None
    if activ == "prelu":
        alpha_ref = refs[idx]
        idx += 1
    add_ref = None
    if has_add:
        add_ref = refs[idx]
        idx += 1
    out_ref = refs[idx]
    acc_ref = refs[idx + 1]

    k = pl.program_id(2)

    @pl.when(k == 0)
    def _():
        acc_ref[...] = jnp.zeros_like(acc_ref)

    # Single MXU matmul per (i, j, k) tile; bf16 operands, f32 accumulation.
    acc_ref[...] += jnp.dot(patch_ref[...], w_ref[...],
                            preferred_element_type=jnp.float32)

    @pl.when(k == pl.num_programs(2) - 1)
    def _():
        y = acc_ref[...] * scale_ref[...] + bias_ref[...]
        if has_add:
            y = y + add_ref[...]
        y = _apply_activ(y, alpha_ref[...] if alpha_ref is not None else None,
                         activ)
        out_ref[...] = y.astype(out_ref.dtype)


def conv_unit_forward(x_nchw, params, *, stride, padding, activ,
                      add_nchw=None, tm=512, tn=256, tk=512):
    """Pallas ConvUnit forward.  x_nchw: [N, Cin, H, W] (PyTorch layout)."""
    weight_oihw = params["weight"]            # (Cout, Cin, KH, KW)
    n, cin, h, w = x_nchw.shape
    cout, cin_w, kh, kw = weight_oihw.shape
    assert cin == cin_w, "grouped conv not supported"  # TODO(synk): groups > 1 / dilation > 1
    ho = (h + 2 * padding - kh) // stride + 1
    wo = (w + 2 * padding - kw) // stride + 1

    # ---- wrapper glue (XLA): layout, spatial pad, im2col, BN folding --------
    x_nhwc = jnp.transpose(x_nchw, (0, 2, 3, 1))
    xp = jnp.pad(x_nhwc,
                 ((0, 0), (padding, padding), (padding, padding), (0, 0)))

    # im2col: K axis ordering is (kh, kw) outer, cin inner -> matches the
    # (KH, KW, Cin, Cout) -> (KH*KW*Cin, Cout) reshape of the weight below.
    cols = []
    for ih in range(kh):
        for iw in range(kw):
            cols.append(lax.slice(
                xp,
                (0, ih, iw, 0),
                (n, ih + stride * (ho - 1) + 1, iw + stride * (wo - 1) + 1, cin),
                (1, stride, stride, 1)))
    K = kh * kw * cin
    M = n * ho * wo
    patches = jnp.concatenate(cols, axis=-1).reshape(M, K)
    w2d = jnp.transpose(weight_oihw, (2, 3, 1, 0)).reshape(K, cout)

    # --- tile sizes / padded dims (lane-dense: 128 multiples on K and Cout) --
    tm = min(tm, _round_up(M, 8))
    Mp = _round_up(M, tm)

    Np_min = _round_up(cout, 128)
    tn = min(tn, Np_min)
    Np = _round_up(Np_min, tn)

    Kp_min = _round_up(K, 128)
    if Kp_min <= tk:
        tk = Kp_min
        Kp = Kp_min
    else:
        nk = -(-Kp_min // tk)                       # ceil div
        tk = _round_up(-(-Kp_min // nk), 128)       # minimize K zero-padding
        Kp = tk * nk

    # bf16 matmul operands (f32 accumulation inside the kernel).
    patches = jnp.pad(patches, ((0, Mp - M), (0, Kp - K))).astype(jnp.bfloat16)
    w2d = jnp.pad(w2d, ((0, Kp - K), (0, Np - cout))).astype(jnp.bfloat16)

    # Fold BN (inference) + conv bias into per-channel scale / bias (f32).
    conv_bias = params.get("conv_bias")
    if conv_bias is None:
        conv_bias = jnp.zeros((cout,), jnp.float32)
    if params.get("gamma") is None:           # bn=None case: conv bias only
        scale = jnp.ones((cout,), jnp.float32)
        bias = conv_bias.astype(jnp.float32)
    else:
        eps = params["bn_eps"]
        scale = params["gamma"] / jnp.sqrt(params["running_var"] + eps)
        bias = params["beta"] + scale * (conv_bias - params["running_mean"])
    scale = jnp.pad(scale.astype(jnp.float32), (0, Np - cout)).reshape(1, Np)
    bias = jnp.pad(bias.astype(jnp.float32), (0, Np - cout)).reshape(1, Np)

    operands = [patches, w2d, scale, bias]
    in_specs = [
        pl.BlockSpec((tm, tk), lambda i, j, k: (i, k)),
        pl.BlockSpec((tk, tn), lambda i, j, k: (k, j)),
        pl.BlockSpec((1, tn), lambda i, j, k: (0, j)),
        pl.BlockSpec((1, tn), lambda i, j, k: (0, j)),
    ]
    if activ == "prelu":
        alpha = jnp.pad(params["prelu_alpha"].astype(jnp.float32),
                        (0, Np - cout)).reshape(1, Np)
        operands.append(alpha)
        in_specs.append(pl.BlockSpec((1, tn), lambda i, j, k: (0, j)))

    has_add = add_nchw is not None
    if has_add:
        add2d = jnp.transpose(add_nchw, (0, 2, 3, 1)).reshape(M, cout)
        add2d = jnp.pad(add2d.astype(jnp.float32),
                        ((0, Mp - M), (0, Np - cout)))
        operands.append(add2d)
        in_specs.append(pl.BlockSpec((tm, tn), lambda i, j, k: (i, j)))

    kernel = functools.partial(conv_unit_kernel, activ=activ, has_add=has_add)

    bytes_accessed = (patches.size * 2 + w2d.size * 2 + Mp * Np * 4
                      + (Mp * Np * 4 if has_add else 0))
    cost = pl.CostEstimate(flops=int(2 * M * K * cout), transcendentals=0,
                           bytes_accessed=int(bytes_accessed))

    out2d = pl.pallas_call(
        kernel,
        out_shape=jax.ShapeDtypeStruct((Mp, Np), jnp.float32),
        grid_spec=pltpu.PrefetchScalarGridSpec(
            num_scalar_prefetch=0,
            grid=(Mp // tm, Np // tn, Kp // tk),
            in_specs=in_specs,
            out_specs=pl.BlockSpec((tm, tn), lambda i, j, k: (i, j)),
            scratch_shapes=[pltpu.VMEM((tm, tn), jnp.float32)]),
        compiler_params=pltpu.CompilerParams(
            dimension_semantics=("parallel", "parallel", "arbitrary"),
            vmem_limit_bytes=64 * 1024 * 1024),
        cost_estimate=cost,
    )(*operands)

    out_nhwc = out2d[:M, :cout].reshape(n, ho, wo, cout)
    return jnp.transpose(out_nhwc, (0, 3, 1, 2))  # back to NCHW


def _reference(x_nchw, params, *, stride, padding, activ, add_nchw=None):
    """Pure-JAX f32 reference (lax conv) for numerical sanity check."""
    y = lax.conv_general_dilated(
        x_nchw.astype(jnp.float32), params["weight"].astype(jnp.float32),
        (stride, stride), [(padding, padding), (padding, padding)],
        dimension_numbers=("NCHW", "OIHW", "NCHW"))
    y = y + params["conv_bias"][None, :, None, None]
    inv = 1.0 / jnp.sqrt(params["running_var"] + params["bn_eps"])
    y = (y - params["running_mean"][None, :, None, None]) * inv[None, :, None, None]
    y = y * params["gamma"][None, :, None, None] + params["beta"][None, :, None, None]
    if add_nchw is not None:
        y = y + add_nchw
    if activ is None:
        return y
    if activ == "relu":
        return jnp.maximum(y, 0.0)
    if activ == "relu6":
        return jnp.clip(y, 0.0, 6.0)
    if activ == "prelu":
        a = params["prelu_alpha"][None, :, None, None]
        return jnp.where(y > 0, y, y * a)
    if activ.startswith("lrelu"):
        leak = float(activ.split("_")[1])
        return jnp.where(y > 0, y, y * leak)
    if activ == "hardswish":
        return y * jnp.clip(y + 3.0, 0.0, 6.0) / 6.0
    raise ValueError(activ)


if __name__ == "__main__":
    # ConvUnit(cin=4, cout=8, k=3, s=1, p=1, activ='relu', bn=1e-5)
    cin, cout, k, s, p = 4, 8, 3, 1, 1
    bn_eps = 1e-5
    n, h, w = 2, 16, 16

    key = jax.random.PRNGKey(0)
    kx, kw_, kg, kb, km, kv, ka = jax.random.split(key, 7)

    x = jax.random.normal(kx, (n, cin, h, w), jnp.float32)
    add = jax.random.normal(ka, (n, cout, h, w), jnp.float32)

    params = {
        "weight": jax.random.normal(kw_, (cout, cin, k, k), jnp.float32) * 0.1,
        "conv_bias": jnp.zeros((cout,), jnp.float32),   # bias=False (bn present)
        "gamma": 1.0 + 0.1 * jax.random.normal(kg, (cout,), jnp.float32),
        "beta": 0.1 * jax.random.normal(kb, (cout,), jnp.float32),
        "running_mean": 0.05 * jax.random.normal(km, (cout,), jnp.float32),
        "running_var": 1.0 + 0.1 * jax.random.uniform(kv, (cout,), jnp.float32),
        "bn_eps": bn_eps,
        "prelu_alpha": jnp.full((cout,), 0.25, jnp.float32),
    }

    # Case 1: relu activation with residual add (exercises add_ref path).
    out = conv_unit_forward(x, params, stride=s, padding=p, activ="relu",
                            add_nchw=add)
    out = jax.block_until_ready(out)
    ref = _reference(x, params, stride=s, padding=p, activ="relu", add_nchw=add)
    assert out.shape == (n, cout, h, w)
    assert jnp.max(jnp.abs(out - ref)) < 6e-2  # bf16 matmul operands, f32 accum

    # Case 2: prelu, no residual (exercises alpha path / specialized signature).
    out2 = conv_unit_forward(x, params, stride=s, padding=p, activ="prelu")
    out2 = jax.block_until_ready(out2)
    ref2 = _reference(x, params, stride=s, padding=p, activ="prelu")
    assert out2.shape == (n, cout, h, w)
    assert jnp.max(jnp.abs(out2 - ref2)) < 6e-2

    print("KERNEL_OK")
</pallas_src>

<mosaic_0001>
module attributes {stable_mosaic.version = 11 : i64} {
  func.func @conv_unit_kernel(%arg0: i32, %arg1: i32, %arg2: i32, %arg3: memref<512x128xbf16, #tpu.memory_space<vmem>>, %arg4: memref<128x128xbf16, #tpu.memory_space<vmem>>, %arg5: memref<1x128xf32, #tpu.memory_space<vmem>>, %arg6: memref<1x128xf32, #tpu.memory_space<vmem>>, %arg7: memref<512x128xf32, #tpu.memory_space<vmem>>, %arg8: memref<512x128xf32, #tpu.memory_space<vmem>>, %arg9: memref<512x128xf32, #tpu.memory_space<vmem>>) attributes {dimension_semantics = [#tpu.dimension_semantics<parallel>, #tpu.dimension_semantics<parallel>, #tpu.dimension_semantics<arbitrary>], iteration_bounds = array<i64: 1, 1, 1>, scalar_prefetch = 0 : i64, scratch_operands = 1 : i64, tpu.core_type = #tpu.core_type<tc>, window_params = [{transform_indices = @transform_0, window_bounds = array<i64: 512, 128>}, {transform_indices = @transform_1, window_bounds = array<i64: 128, 128>}, {transform_indices = @transform_2, window_bounds = array<i64: 1, 128>}, {transform_indices = @transform_3, window_bounds = array<i64: 1, 128>}, {transform_indices = @transform_4, window_bounds = array<i64: 512, 128>}, {transform_indices = @transform_5, window_bounds = array<i64: 512, 128>}]} {
    %c0_i32 = arith.constant 0 : i32
    %0 = arith.cmpi eq, %arg2, %c0_i32 : i32
    %1 = arith.extui %0 : i1 to i32
    %c0_i32_0 = arith.constant 0 : i32
    %2 = arith.cmpi ne, %1, %c0_i32_0 : i32
    scf.if %2 {
      %cst_10 = arith.constant 0.000000e+00 : f32
      %12 = vector.broadcast %cst_10 : f32 to vector<512x128xf32>
      %c0_11 = arith.constant 0 : index
      %c0_12 = arith.constant 0 : index
      %13 = vector.load %arg9[%c0_11, %c0_12] : memref<512x128xf32, #tpu.memory_space<vmem>>, vector<512x128xf32>
      tpu.vector_store %arg9[%c0_11, %c0_12], %12 {strides = array<i32>} : memref<512x128xf32, #tpu.memory_space<vmem>>, vector<512x128xf32>,
    } else {
    }
    %c0 = arith.constant 0 : index
    %c0_1 = arith.constant 0 : index
    %3 = vector.load %arg9[%c0, %c0_1] : memref<512x128xf32, #tpu.memory_space<vmem>>, vector<512x128xf32>
    %c0_2 = arith.constant 0 : index
    %c0_3 = arith.constant 0 : index
    %4 = vector.load %arg3[%c0_2, %c0_3] : memref<512x128xbf16, #tpu.memory_space<vmem>>, vector<512x128xbf16>
    %c0_4 = arith.constant 0 : index
    %c0_5 = arith.constant 0 : index
    %5 = vector.load %arg4[%c0_4, %c0_5] : memref<128x128xbf16, #tpu.memory_space<vmem>>, vector<128x128xbf16>
    %cst = arith.constant dense<0.000000e+00> : vector<512x128xf32>
    %6 = tpu.matmul %4, %5, %cst {dimension_numbers = #tpu.dot_dimension_numbers<[1], [0], [0], [1], [0, 0, 1, 1], [], []>} : vector<512x128xbf16>, vector<128x128xbf16>, vector<512x128xf32> -> vector<512x128xf32>
    %7 = arith.addf %3, %6 : vector<512x128xf32>
    %c0_6 = arith.constant 0 : index
    %c0_7 = arith.constant 0 : index
    %8 = vector.load %arg9[%c0_6, %c0_7] : memref<512x128xf32, #tpu.memory_space<vmem>>, vector<512x128xf32>
    tpu.vector_store %arg9[%c0_6, %c0_7], %7 {strides = array<i32>} : memref<512x128xf32, #tpu.memory_space<vmem>>, vector<512x128xf32>,
    %c0_i32_8 = arith.constant 0 : i32
    %9 = arith.cmpi eq, %arg2, %c0_i32_8 : i32
    %10 = arith.extui %9 : i1 to i32
    %c0_i32_9 = arith.constant 0 : i32
    %11 = arith.cmpi ne, %10, %c0_i32_9 : i32
    scf.if %11 {
      %c0_10 = arith.constant 0 : index
      %c0_11 = arith.constant 0 : index
      %12 = vector.load %arg9[%c0_10, %c0_11] : memref<512x128xf32, #tpu.memory_space<vmem>>, vector<512x128xf32>
      %c0_12 = arith.constant 0 : index
      %c0_13 = arith.constant 0 : index
      %13 = vector.load %arg5[%c0_12, %c0_13] : memref<1x128xf32, #tpu.memory_space<vmem>>, vector<1x128xf32>
      %14 = vector.broadcast %13 : vector<1x128xf32> to vector<512x128xf32>
      %15 = arith.mulf %12, %14 : vector<512x128xf32>
      %c0_14 = arith.constant 0 : index
      %c0_15 = arith.constant 0 : index
      %16 = vector.load %arg6[%c0_14, %c0_15] : memref<1x128xf32, #tpu.memory_space<vmem>>, vector<1x128xf32>
      %17 = vector.broadcast %16 : vector<1x128xf32> to vector<512x128xf32>
      %18 = arith.addf %15, %17 : vector<512x128xf32>
      %c0_16 = arith.constant 0 : index
      %c0_17 = arith.constant 0 : index
      %19 = vector.load %arg7[%c0_16, %c0_17] : memref<512x128xf32, #tpu.memory_space<vmem>>, vector<512x128xf32>
      %20 = arith.addf %18, %19 : vector<512x128xf32>
      %cst_18 = arith.constant 0.000000e+00 : f32
      %21 = vector.broadcast %cst_18 : f32 to vector<512x128xf32>
      %22 = arith.maximumf %20, %21 : vector<512x128xf32>
      %c0_19 = arith.constant 0 : index
      %c0_20 = arith.constant 0 : index
      %23 = vector.load %arg8[%c0_19, %c0_20] : memref<512x128xf32, #tpu.memory_space<vmem>>, vector<512x128xf32>
      tpu.vector_store %arg8[%c0_19, %c0_20], %22 {strides = array<i32>} : memref<512x128xf32, #tpu.memory_space<vmem>>, vector<512x128xf32>,
    } else {
    }
    return
  }
  func.func @transform_0(%arg0: i32, %arg1: i32, %arg2: i32) -> (i32, i32) {
    %c0_i32 = arith.constant 0 : i32
    return %arg0, %arg2 : i32, i32
  }
  func.func @transform_1(%arg0: i32, %arg1: i32, %arg2: i32) -> (i32, i32) {
    %c0_i32 = arith.constant 0 : i32
    return %arg2, %arg1 : i32, i32
  }
  func.func @transform_2(%arg0: i32, %arg1: i32, %arg2: i32) -> (i32, i32) {
    %c0_i32 = arith.constant 0 : i32
    %c0_i32_0 = arith.constant 0 : i32
    return %c0_i32, %arg1 : i32, i32
  }
  func.func @transform_3(%arg0: i32, %arg1: i32, %arg2: i32) -> (i32, i32) {
    %c0_i32 = arith.constant 0 : i32
    %c0_i32_0 = arith.constant 0 : i32
    return %c0_i32, %arg1 : i32, i32
  }
  func.func @transform_4(%arg0: i32, %arg1: i32, %arg2: i32) -> (i32, i32) {
    %c0_i32 = arith.constant 0 : i32
    return %arg0, %arg1 : i32, i32
  }
  func.func @transform_5(%arg0: i32, %arg1: i32, %arg2: i32) -> (i32, i32) {
    %c0_i32 = arith.constant 0 : i32
    return %arg0, %arg1 : i32, i32
  }
}

</mosaic_0001>

<llo_original>
// kernel: tpu_custom_call.1
$region0: #{tpu_custom_call.1}
  #allocation0 [shape = 'u32[]', space=smem, size = 0x4, offset = 0x4, fixed_abs, tag = 'smem constant byte address 0x4 - core index']
  #allocation1 [shape = 'u32[72,128]{1,0:T(1,128)}', space=vmem, size = 0x9000, scoped, tag = 'internal scratch']
  #allocation2 [shape = 'f32[512,128]{1,0:T(8,128)}', space=vmem, size = 0x40000, scoped, tag = 'scratch operand']
  %s0 = inlined_call_operand.hbm [shape: bf16[512,128], index: 0, kind: input, shape index: {}]
  %s1 = inlined_call_operand.hbm [shape: bf16[128,128], index: 1, kind: input, shape index: {}]
  %s2 = inlined_call_operand.vmem [shape: f32[1,128], index: 2, kind: input, shape index: {}]
  %s3 = inlined_call_operand.vmem [shape: f32[1,128], index: 3, kind: input, shape index: {}]
  %s4 = inlined_call_operand.hbm [shape: f32[512,128], index: 4, kind: input, shape index: {}]
  %s5 = inlined_call_operand.hbm [shape: f32[512,128], index: 5, kind: output, shape index: {}]
  %s6 = sld [smem:[#allocation0]]
  $region50: #{tpu_custom_call.1} parent=0
    _
  %s8 = ssub.s32 1, %s6
  %s9 = scalar_select 0, %s8, %s6
  $region1: #{tpu_custom_call.1} parent=0
    #allocation3 [shape = 'u8[131072]{0}', space=vmem, size = 0x20000, scoped, tag = 'input window, operand 0, single buffered']
    #allocation4 [shape = 's32[1]{0}', space=sflag, size = 0x4, scoped, tag = 'scoped memory for tpu_custom_call.1']
    #allocation5 [shape = 's32[1]{0}', space=sflag, size = 0x4, scoped, tag = 'scoped memory for tpu_custom_call.1']
    #allocation6 [shape = 'u8[32768]{0}', space=vmem, size = 0x8000, scoped, tag = 'input window, operand 1, single buffered']
    #allocation7 [shape = 's32[1]{0}', space=sflag, size = 0x4, scoped, tag = 'scoped memory for tpu_custom_call.1']
    #allocation8 [shape = 'u8[262144]{0}', space=vmem, size = 0x40000, scoped, tag = 'input window, operand 4, single buffered']
    #allocation9 [shape = 'u8[262144]{0}', space=vmem, size = 0x40000, scoped, tag = 'output window, operand 0, single buffered']
    %10 = vsyncpa [#allocation4], 0
    %11 = vsyncpa [#allocation7], 0
    %12 = vsyncpa [#allocation5], 0
    // Predicated region
    $region2: #{tpu_custom_call.1} parent=1 // pred_check
      _
    $region3: #{tpu_custom_call.1} parent=1 // pred_check_branch
      %14 = sbr.rel (0) target = $region5
    $region4: #{tpu_custom_call.1} parent=1 // pred_region
      %16 = vsyncadd [#allocation4], 0
      %s17 = sshll.u32 %s0, 4
      %s18 = int_to_ptr.hbm [resolvable:$true] %s17
      %s19 = sshll.u32 [#allocation3], 4
      %s20 = int_to_ptr.vmem [resolvable:$true] %s19
      %25 = dma.hbm_to_vmem [thread:$0]  %s18, 4096, %s20, [#allocation4], 64, 64, 4
    $region5: #{tpu_custom_call.1} parent=1 // pred_fallthru
      _
    // Predicated region
    $region6: #{tpu_custom_call.1} parent=1 // pred_check
      _
    $region7: #{tpu_custom_call.1} parent=1 // pred_check_branch
      %27 = sbr.rel (0) target = $region9
    $region8: #{tpu_custom_call.1} parent=1 // pred_region
      %29 = vsyncadd [#allocation7], 0
      %s30 = sshll.u32 %s1, 4
      %s31 = int_to_ptr.hbm [resolvable:$true] %s30
      %s32 = sshll.u32 [#allocation6], 4
      %s33 = int_to_ptr.vmem [resolvable:$true] %s32
      %38 = dma.hbm_to_vmem [thread:$0]  %s31, 1024, %s33, [#allocation7], 64, 64, 4
    $region9: #{tpu_custom_call.1} parent=1 // pred_fallthru
      _
    // Predicated region
    $region10: #{tpu_custom_call.1} parent=1 // pred_check
      _
    $region11: #{tpu_custom_call.1} parent=1 // pred_check_branch
      %40 = sbr.rel (0) target = $region13
    $region12: #{tpu_custom_call.1} parent=1 // pred_region
      _
    $region13: #{tpu_custom_call.1} parent=1 // pred_fallthru
      _
    // Predicated region
    $region14: #{tpu_custom_call.1} parent=1 // pred_check
      _
    $region15: #{tpu_custom_call.1} parent=1 // pred_check_branch
      %42 = sbr.rel (0) target = $region17
    $region16: #{tpu_custom_call.1} parent=1 // pred_region
      _
    $region17: #{tpu_custom_call.1} parent=1 // pred_fallthru
      _
    // Predicated region
    $region18: #{tpu_custom_call.1} parent=1 // pred_check
      _
    $region19: #{tpu_custom_call.1} parent=1 // pred_check_branch
      %44 = sbr.rel (0) target = $region21
    $region20: #{tpu_custom_call.1} parent=1 // pred_region
      %46 = vsyncadd [#allocation7], 0
      %s47 = sshll.u32 %s4, 4
      %s48 = int_to_ptr.hbm [resolvable:$true] %s47
      %s49 = sshll.u32 [#allocation8], 4
      %s50 = int_to_ptr.vmem [resolvable:$true] %s49
      %55 = dma.hbm_to_vmem [thread:$0]  %s48, 8192, %s50, [#allocation7], 128, 128, 8
    $region21: #{tpu_custom_call.1} parent=1 // pred_fallthru
      _
    // Predicated region
    $region22: #{tpu_custom_call.1} parent=1 // pred_check
      _
    $region23: #{tpu_custom_call.1} parent=1 // pred_check_branch
      %57 = sbr.rel (0) target = $region25
    $region24: #{tpu_custom_call.1} parent=1 // pred_region
      %59 = dma.done [#allocation4], 4096
    $region25: #{tpu_custom_call.1} parent=1 // pred_fallthru
      _
    // Predicated region
    $region26: #{tpu_custom_call.1} parent=1 // pred_check
      _
    $region27: #{tpu_custom_call.1} parent=1 // pred_check_branch
      %61 = sbr.rel (0) target = $region29
    $region28: #{tpu_custom_call.1} parent=1 // pred_region
      %63 = dma.done [#allocation7], 1024
    $region29: #{tpu_custom_call.1} parent=1 // pred_fallthru
      _
    // Predicated region
    $region30: #{tpu_custom_call.1} parent=1 // pred_check
      _
    $region31: #{tpu_custom_call.1} parent=1 // pred_check_branch
      %65 = sbr.rel (0) target = $region33
    $region32: #{tpu_custom_call.1} parent=1 // pred_region
      %67 = dma.done [#allocation7], 8192
    $region33: #{tpu_custom_call.1} parent=1 // pred_fallthru
      _
    %p68 = scmp.eq.s32.totalorder 0, 0
    // Predicated region
    $region34: #{tpu_custom_call.1} parent=1 // pred_check
      %p69 = pneg %p68
    $region35: #{tpu_custom_call.1} parent=1 // pred_check_branch
      %71 = sbr.rel (%p69) target = $region37
    $region36: #{tpu_custom_call.1} parent=1 // pred_region
      %72 = vst [vmem:[#allocation2] sm:$0xff] 0.0
      %73 = vst [vmem:[#allocation2 + $0x8] sm:$0xff] 0.0
      %74 = vst [vmem:[#allocation2 + $0x10] sm:$0xff] 0.0
      %75 = vst [vmem:[#allocation2 + $0x18] sm:$0xff] 0.0
      %76 = vst [vmem:[#allocation2 + $0x20] sm:$0xff] 0.0
      %77 = vst [vmem:[#allocation2 + $0x28] sm:$0xff] 0.0
      %78 = vst [vmem:[#allocation2 + $0x30] sm:$0xff] 0.0
      %79 = vst [vmem:[#allocation2 + $0x38] sm:$0xff] 0.0
      %80 = vst [vmem:[#allocation2 + $0x40] sm:$0xff] 0.0
      %81 = vst [vmem:[#allocation2 + $0x48] sm:$0xff] 0.0
      %82 = vst [vmem:[#allocation2 + $0x50] sm:$0xff] 0.0
      %83 = vst [vmem:[#allocation2 + $0x58] sm:$0xff] 0.0
      %84 = vst [vmem:[#allocation2 + $0x60] sm:$0xff] 0.0
      %85 = vst [vmem:[#allocation2 + $0x68] sm:$0xff] 0.0
      %86 = vst [vmem:[#allocation2 + $0x70] sm:$0xff] 0.0
      %87 = vst [vmem:[#allocation2 + $0x78] sm:$0xff] 0.0
      %88 = vst [vmem:[#allocation2 + $0x80] sm:$0xff] 0.0
      %89 = vst [vmem:[#allocation2 + $0x88] sm:$0xff] 0.0
      %90 = vst [vmem:[#allocation2 + $0x90] sm:$0xff] 0.0
      %91 = vst [vmem:[#allocation2 + $0x98] sm:$0xff] 0.0
      %92 = vst [vmem:[#allocation2 + $0xa0] sm:$0xff] 0.0
      %93 = vst [vmem:[#allocation2 + $0xa8] sm:$0xff] 0.0
      %94 = vst [vmem:[#allocation2 + $0xb0] sm:$0xff] 0.0
      %95 = vst [vmem:[#allocation2 + $0xb8] sm:$0xff] 0.0
      %96 = vst [vmem:[#allocation2 + $0xc0] sm:$0xff] 0.0
      %97 = vst [vmem:[#allocation2 + $0xc8] sm:$0xff] 0.0
      %98 = vst [vmem:[#allocation2 + $0xd0] sm:$0xff] 0.0
      %99 = vst [vmem:[#allocation2 + $0xd8] sm:$0xff] 0.0
      %100 = vst [vmem:[#allocation2 + $0xe0] sm:$0xff] 0.0
      %101 = vst [vmem:[#allocation2 + $0xe8] sm:$0xff] 0.0
      %102 = vst [vmem:[#allocation2 + $0xf0] sm:$0xff] 0.0
      %103 = vst [vmem:[#allocation2 + $0xf8] sm:$0xff] 0.0
      %104 = vst [vmem:[#allocation2 + $0x100] sm:$0xff] 0.0
      %105 = vst [vmem:[#allocation2 + $0x108] sm:$0xff] 0.0
      %106 = vst [vmem:[#allocation2 + $0x110] sm:$0xff] 0.0
      %107 = vst [vmem:[#allocation2 + $0x118] sm:$0xff] 0.0
      %108 = vst [vmem:[#allocation2 + $0x120] sm:$0xff] 0.0
      %109 = vst [vmem:[#allocation2 + $0x128] sm:$0xff] 0.0
      %110 = vst [vmem:[#allocation2 + $0x130] sm:$0xff] 0.0
      %111 = vst [vmem:[#allocation2 + $0x138] sm:$0xff] 0.0
      %112 = vst [vmem:[#allocation2 + $0x140] sm:$0xff] 0.0
      %113 = vst [vmem:[#allocation2 + $0x148] sm:$0xff] 0.0
      %114 = vst [vmem:[#allocation2 + $0x150] sm:$0xff] 0.0
      %115 = vst [vmem:[#allocation2 + $0x158] sm:$0xff] 0.0
      %116 = vst [vmem:[#allocation2 + $0x160] sm:$0xff] 0.0
      %117 = vst [vmem:[#allocation2 + $0x168] sm:$0xff] 0.0
      %118 = vst [vmem:[#allocation2 + $0x170] sm:$0xff] 0.0
      %119 = vst [vmem:[#allocation2 + $0x178] sm:$0xff] 0.0
      %120 = vst [vmem:[#allocation2 + $0x180] sm:$0xff] 0.0
      %121 = vst [vmem:[#allocation2 + $0x188] sm:$0xff] 0.0
      %122 = vst [vmem:[#allocation2 + $0x190] sm:$0xff] 0.0
      %123 = vst [vmem:[#allocation2 + $0x198] sm:$0xff] 0.0
      %124 = vst [vmem:[#allocation2 + $0x1a0] sm:$0xff] 0.0
      %125 = vst [vmem:[#allocation2 + $0x1a8] sm:$0xff] 0.0
      %126 = vst [vmem:[#allocation2 + $0x1b0] sm:$0xff] 0.0
      %127 = vst [vmem:[#allocation2 + $0x1b8] sm:$0xff] 0.0
      %128 = vst [vmem:[#allocation2 + $0x1c0] sm:$0xff] 0.0
      %129 = vst [vmem:[#allocation2 + $0x1c8] sm:$0xff] 0.0
      %130 = vst [vmem:[#allocation2 + $0x1d0] sm:$0xff] 0.0
      %131 = vst [vmem:[#allocation2 + $0x1d8] sm:$0xff] 0.0
      %132 = vst [vmem:[#allocation2 + $0x1e0] sm:$0xff] 0.0
      %133 = vst [vmem:[#allocation2 + $0x1e8] sm:$0xff] 0.0
      %134 = vst [vmem:[#allocation2 + $0x1f0] sm:$0xff] 0.0
      %135 = vst [vmem:[#allocation2 + $0x1f8] sm:$0xff] 0.0
    $region37: #{tpu_custom_call.1} parent=1 // pred_fallthru
      _
    %v136 = vld [vmem:[#allocation2] sm:$0xff]
    %v137 = vld [vmem:[#allocation2 + $0x8] sm:$0xff]
    %v138 = vld [vmem:[#allocation2 + $0x10] sm:$0xff]
    %v139 = vld [vmem:[#allocation2 + $0x18] sm:$0xff]
    %v140 = vld [vmem:[#allocation2 + $0x20] sm:$0xff]
    %v141 = vld [vmem:[#allocation2 + $0x28] sm:$0xff]
    %v142 = vld [vmem:[#allocation2 + $0x30] sm:$0xff]
    %v143 = vld [vmem:[#allocation2 + $0x38] sm:$0xff]
    %v144 = vld [vmem:[#allocation2 + $0x40] sm:$0xff]
    %v145 = vld [vmem:[#allocation2 + $0x48] sm:$0xff]
    %v146 = vld [vmem:[#allocation2 + $0x50] sm:$0xff]
    %v147 = vld [vmem:[#allocation2 + $0x58] sm:$0xff]
    %v148 = vld [vmem:[#allocation2 + $0x60] sm:$0xff]
    %v149 = vld [vmem:[#allocation2 + $0x68] sm:$0xff]
    %v150 = vld [vmem:[#allocation2 + $0x70] sm:$0xff]
    %v151 = vld [vmem:[#allocation2 + $0x78] sm:$0xff]
    %v152 = vld [vmem:[#allocation2 + $0x80] sm:$0xff]
    %v153 = vld [vmem:[#allocation2 + $0x88] sm:$0xff]
    %v154 = vld [vmem:[#allocation2 + $0x90] sm:$0xff]
    %v155 = vld [vmem:[#allocation2 + $0x98] sm:$0xff]
    %v156 = vld [vmem:[#allocation2 + $0xa0] sm:$0xff]
    %v157 = vld [vmem:[#allocation2 + $0xa8] sm:$0xff]
    %v158 = vld [vmem:[#allocation2 + $0xb0] sm:$0xff]
    %v159 = vld [vmem:[#allocation2 + $0xb8] sm:$0xff]
    %v160 = vld [vmem:[#allocation2 + $0xc0] sm:$0xff]
    %v161 = vld [vmem:[#allocation2 + $0xc8] sm:$0xff]
    %v162 = vld [vmem:[#allocation2 + $0xd0] sm:$0xff]
    %v163 = vld [vmem:[#allocation2 + $0xd8] sm:$0xff]
    %v164 = vld [vmem:[#allocation2 + $0xe0] sm:$0xff]
    %v165 = vld [vmem:[#allocation2 + $0xe8] sm:$0xff]
    %v166 = vld [vmem:[#allocation2 + $0xf0] sm:$0xff]
    %v167 = vld [vmem:[#allocation2 + $0xf8] sm:$0xff]
    %v168 = vld [vmem:[#allocation2 + $0x100] sm:$0xff]
    %v169 = vld [vmem:[#allocation2 + $0x108] sm:$0xff]
    %v170 = vld [vmem:[#allocation2 + $0x110] sm:$0xff]
    %v171 = vld [vmem:[#allocation2 + $0x118] sm:$0xff]
    %v172 = vld [vmem:[#allocation2 + $0x120] sm:$0xff]
    %v173 = vld [vmem:[#allocation2 + $0x128] sm:$0xff]
    %v174 = vld [vmem:[#allocation2 + $0x130] sm:$0xff]
    %v175 = vld [vmem:[#allocation2 + $0x138] sm:$0xff]
    %v176 = vld [vmem:[#allocation2 + $0x140] sm:$0xff]
    %v177 = vld [vmem:[#allocation2 + $0x148] sm:$0xff]
    %v178 = vld [vmem:[#allocation2 + $0x150] sm:$0xff]
    %v179 = vld [vmem:[#allocation2 + $0x158] sm:$0xff]
    %v180 = vld [vmem:[#allocation2 + $0x160] sm:$0xff]
    %v181 = vld [vmem:[#allocation2 + $0x168] sm:$0xff]
    %v182 = vld [vmem:[#allocation2 + $0x170] sm:$0xff]
    %v183 = vld [vmem:[#allocation2 + $0x178] sm:$0xff]
    %v184 = vld [vmem:[#allocation2 + $0x180] sm:$0xff]
    %v185 = vld [vmem:[#allocation2 + $0x188] sm:$0xff]
    %v186 = vld [vmem:[#allocation2 + $0x190] sm:$0xff]
    %v187 = vld [vmem:[#allocation2 + $0x198] sm:$0xff]
    %v188 = vld [vmem:[#allocation2 + $0x1a0] sm:$0xff]
    %v189 = vld [vmem:[#allocation2 + $0x1a8] sm:$0xff]
    %v190 = vld [vmem:[#allocation2 + $0x1b0] sm:$0xff]
    %v191 = vld [vmem:[#allocation2 + $0x1b8] sm:$0xff]
    %v192 = vld [vmem:[#allocation2 + $0x1c0] sm:$0xff]
    %v193 = vld [vmem:[#allocation2 + $0x1c8] sm:$0xff]
    %v194 = vld [vmem:[#allocation2 + $0x1d0] sm:$0xff]
    %v195 = vld [vmem:[#allocation2 + $0x1d8] sm:$0xff]
    %v196 = vld [vmem:[#allocation2 + $0x1e0] sm:$0xff]
    %v197 = vld [vmem:[#allocation2 + $0x1e8] sm:$0xff]
    %v198 = vld [vmem:[#allocation2 + $0x1f0] sm:$0xff]
    %v199 = vld [vmem:[#allocation2 + $0x1f8] sm:$0xff]
    %v200 = vld [vmem:[#allocation3] sm:$0xf]
    %v201 = vld [vmem:[#allocation3 + $0x4] sm:$0xf]
    %v202 = vld [vmem:[#allocation3 + $0x8] sm:$0xf]
    %v203 = vld [vmem:[#allocation3 + $0xc] sm:$0xf]
    %v204 = vld [vmem:[#allocation3 + $0x10] sm:$0xf]
    %v205 = vld [vmem:[#allocation3 + $0x14] sm:$0xf]
    %v206 = vld [vmem:[#allocation3 + $0x18] sm:$0xf]
    %v207 = vld [vmem:[#allocation3 + $0x1c] sm:$0xf]
    %v208 = vld [vmem:[#allocation3 + $0x20] sm:$0xf]
    %v209 = vld [vmem:[#allocation3 + $0x24] sm:$0xf]
    %v210 = vld [vmem:[#allocation3 + $0x28] sm:$0xf]
    %v211 = vld [vmem:[#allocation3 + $0x2c] sm:$0xf]
    %v212 = vld [vmem:[#allocation3 + $0x30] sm:$0xf]
    %v213 = vld [vmem:[#allocation3 + $0x34] sm:$0xf]
    %v214 = vld [vmem:[#allocation3 + $0x38] sm:$0xf]
    %v215 = vld [vmem:[#allocation3 + $0x3c] sm:$0xf]
    %v216 = vld [vmem:[#allocation3 + $0x40] sm:$0xf]
    %v217 = vld [vmem:[#allocation3 + $0x44] sm:$0xf]
    %v218 = vld [vmem:[#allocation3 + $0x48] sm:$0xf]
    %v219 = vld [vmem:[#allocation3 + $0x4c] sm:$0xf]
    %v220 = vld [vmem:[#allocation3 + $0x50] sm:$0xf]
    %v221 = vld [vmem:[#allocation3 + $0x54] sm:$0xf]
    %v222 = vld [vmem:[#allocation3 + $0x58] sm:$0xf]
    %v223 = vld [vmem:[#allocation3 + $0x5c] sm:$0xf]
    %v224 = vld [vmem:[#allocation3 + $0x60] sm:$0xf]
    %v225 = vld [vmem:[#allocation3 + $0x64] sm:$0xf]
    %v226 = vld [vmem:[#allocation3 + $0x68] sm:$0xf]
    %v227 = vld [vmem:[#allocation3 + $0x6c] sm:$0xf]
    %v228 = vld [vmem:[#allocation3 + $0x70] sm:$0xf]
    %v229 = vld [vmem:[#allocation3 + $0x74] sm:$0xf]
    %v230 = vld [vmem:[#allocation3 + $0x78] sm:$0xf]
    %v231 = vld [vmem:[#allocation3 + $0x7c] sm:$0xf]
    %v232 = vld [vmem:[#allocation3 + $0x80] sm:$0xf]
    %v233 = vld [vmem:[#allocation3 + $0x84] sm:$0xf]
    %v234 = vld [vmem:[#allocation3 + $0x88] sm:$0xf]
    %v235 = vld [vmem:[#allocation3 + $0x8c] sm:$0xf]
    %v236 = vld [vmem:[#allocation3 + $0x90] sm:$0xf]
    %v237 = vld [vmem:[#allocation3 + $0x94] sm:$0xf]
    %v238 = vld [vmem:[#allocation3 + $0x98] sm:$0xf]
    %v239 = vld [vmem:[#allocation3 + $0x9c] sm:$0xf]
    %v240 = vld [vmem:[#allocation3 + $0xa0] sm:$0xf]
    %v241 = vld [vmem:[#allocation3 + $0xa4] sm:$0xf]
    %v242 = vld [vmem:[#allocation3 + $0xa8] sm:$0xf]
    %v243 = vld [vmem:[#allocation3 + $0xac] sm:$0xf]
    %v244 = vld [vmem:[#allocation3 + $0xb0] sm:$0xf]
    %v245 = vld [vmem:[#allocation3 + $0xb4] sm:$0xf]
    %v246 = vld [vmem:[#allocation3 + $0xb8] sm:$0xf]
    %v247 = vld [vmem:[#allocation3 + $0xbc] sm:$0xf]
    %v248 = vld [vmem:[#allocation3 + $0xc0] sm:$0xf]
    %v249 = vld [vmem:[#allocation3 + $0xc4] sm:$0xf]
    %v250 = vld [vmem:[#allocation3 + $0xc8] sm:$0xf]
    %v251 = vld [vmem:[#allocation3 + $0xcc] sm:$0xf]
    %v252 = vld [vmem:[#allocation3 + $0xd0] sm:$0xf]
    %v253 = vld [vmem:[#allocation3 + $0xd4] sm:$0xf]
    %v254 = vld [vmem:[#allocation3 + $0xd8] sm:$0xf]
    %v255 = vld [vmem:[#allocation3 + $0xdc] sm:$0xf]
    %v256 = vld [vmem:[#allocation3 + $0xe0] sm:$0xf]
    %v257 = vld [vmem:[#allocation3 + $0xe4] sm:$0xf]
    %v258 = vld [vmem:[#allocation3 + $0xe8] sm:$0xf]
    %v259 = vld [vmem:[#allocation3 + $0xec] sm:$0xf]
    %v260 = vld [vmem:[#allocation3 + $0xf0] sm:$0xf]
    %v261 = vld [vmem:[#allocation3 + $0xf4] sm:$0xf]
    %v262 = vld [vmem:[#allocation3 + $0xf8] sm:$0xf]
    %v263 = vld [vmem:[#allocation3 + $0xfc] sm:$0xf]
    %v264 = vld [vmem:[#allocation6] sm:$0xf]
    %v265 = vld [vmem:[#allocation6 + $0x4] sm:$0xf]
    %v266 = vld [vmem:[#allocation6 + $0x8] sm:$0xf]
    %v267 = vld [vmem:[#allocation6 + $0xc] sm:$0xf]
    %v268 = vld [vmem:[#allocation6 + $0x10] sm:$0xf]
    %v269 = vld [vmem:[#allocation6 + $0x14] sm:$0xf]
    %v270 = vld [vmem:[#allocation6 + $0x18] sm:$0xf]
    %v271 = vld [vmem:[#allocation6 + $0x1c] sm:$0xf]
    %v272 = vld [vmem:[#allocation6 + $0x20] sm:$0xf]
    %v273 = vld [vmem:[#allocation6 + $0x24] sm:$0xf]
    %v274 = vld [vmem:[#allocation6 + $0x28] sm:$0xf]
    %v275 = vld [vmem:[#allocation6 + $0x2c] sm:$0xf]
    %v276 = vld [vmem:[#allocation6 + $0x30] sm:$0xf]
    %v277 = vld [vmem:[#allocation6 + $0x34] sm:$0xf]
    %v278 = vld [vmem:[#allocation6 + $0x38] sm:$0xf]
    %v279 = vld [vmem:[#allocation6 + $0x3c] sm:$0xf]
    %v344 = vunpack.c.l.b16 %v200
    %v345 = vunpack.c.l.b16 %v201
    %v346 = vunpack.c.l.b16 %v202
    %v347 = vunpack.c.l.b16 %v203
    %v348 = vunpack.c.l.b16 %v204
    %v349 = vunpack.c.l.b16 %v205
    %v350 = vunpack.c.l.b16 %v206
    %v351 = vunpack.c.l.b16 %v207
    %v352 = vunpack.c.l.b16 %v208
    %v353 = vunpack.c.l.b16 %v209
    %v354 = vunpack.c.l.b16 %v210
    %v355 = vunpack.c.l.b16 %v211
    %v356 = vunpack.c.l.b16 %v212
    %v357 = vunpack.c.l.b16 %v213
    %v358 = vunpack.c.l.b16 %v214
    %v359 = vunpack.c.l.b16 %v215
    %v360 = vunpack.c.l.b16 %v216
    %v361 = vunpack.c.l.b16 %v217
    %v362 = vunpack.c.l.b16 %v218
    %v363 = vunpack.c.l.b16 %v219
    %v364 = vunpack.c.l.b16 %v220
    %v365 = vunpack.c.l.b16 %v221
    %v366 = vunpack.c.l.b16 %v222
    %v367 = vunpack.c.l.b16 %v223
    %v368 = vunpack.c.l.b16 %v224
    %v369 = vunpack.c.l.b16 %v225
    %v370 = vunpack.c.l.b16 %v226
    %v371 = vunpack.c.l.b16 %v227
    %v372 = vunpack.c.l.b16 %v228
    %v373 = vunpack.c.l.b16 %v229
    %v374 = vunpack.c.l.b16 %v230
    %v375 = vunpack.c.l.b16 %v231
    %v376 = vunpack.c.l.b16 %v232
    %v377 = vunpack.c.l.b16 %v233
    %v378 = vunpack.c.l.b16 %v234
    %v379 = vunpack.c.l.b16 %v235
    %v380 = vunpack.c.l.b16 %v236
    %v381 = vunpack.c.l.b16 %v237
    %v382 = vunpack.c.l.b16 %v238
    %v383 = vunpack.c.l.b16 %v239
    %v384 = vunpack.c.l.b16 %v240
    %v385 = vunpack.c.l.b16 %v241
    %v386 = vunpack.c.l.b16 %v242
    %v387 = vunpack.c.l.b16 %v243
    %v388 = vunpack.c.l.b16 %v244
    %v389 = vunpack.c.l.b16 %v245
    %v390 = vunpack.c.l.b16 %v246
    %v391 = vunpack.c.l.b16 %v247
    %v392 = vunpack.c.l.b16 %v248
    %v393 = vunpack.c.l.b16 %v249
    %v394 = vunpack.c.l.b16 %v250
    %v395 = vunpack.c.l.b16 %v251
    %v396 = vunpack.c.l.b16 %v252
    %v397 = vunpack.c.l.b16 %v253
    %v398 = vunpack.c.l.b16 %v254
    %v399 = vunpack.c.l.b16 %v255
    %v400 = vunpack.c.l.b16 %v256
    %v401 = vunpack.c.l.b16 %v257
    %v402 = vunpack.c.l.b16 %v258
    %v403 = vunpack.c.l.b16 %v259
    %v404 = vunpack.c.l.b16 %v260
    %v405 = vunpack.c.l.b16 %v261
    %v406 = vunpack.c.l.b16 %v262
    %v407 = vunpack.c.l.b16 %v263
    %v408 = vpack.c.b16 %v345, %v344
    %v409 = vpack.c.b16 %v347, %v346
    %v410 = vpack.c.b16 %v349, %v348
    %v411 = vpack.c.b16 %v351, %v350
    %v412 = vpack.c.b16 %v353, %v352
    %v413 = vpack.c.b16 %v355, %v354
    %v414 = vpack.c.b16 %v357, %v356
    %v415 = vpack.c.b16 %v359, %v358
    %v416 = vpack.c.b16 %v361, %v360
    %v417 = vpack.c.b16 %v363, %v362
    %v418 = vpack.c.b16 %v365, %v364
    %v419 = vpack.c.b16 %v367, %v366
    %v420 = vpack.c.b16 %v369, %v368
    %v421 = vpack.c.b16 %v371, %v370
    %v422 = vpack.c.b16 %v373, %v372
    %v423 = vpack.c.b16 %v375, %v374
    %v424 = vpack.c.b16 %v377, %v376
    %v425 = vpack.c.b16 %v379, %v378
    %v426 = vpack.c.b16 %v381, %v380
    %v427 = vpack.c.b16 %v383, %v382
    %v428 = vpack.c.b16 %v385, %v384
    %v429 = vpack.c.b16 %v387, %v386
    %v430 = vpack.c.b16 %v389, %v388
    %v431 = vpack.c.b16 %v391, %v390
    %v432 = vpack.c.b16 %v393, %v392
    %v433 = vpack.c.b16 %v395, %v394
    %v434 = vpack.c.b16 %v397, %v396
    %v435 = vpack.c.b16 %v399, %v398
    %v436 = vpack.c.b16 %v401, %v400
    %v437 = vpack.c.b16 %v403, %v402
    %v438 = vpack.c.b16 %v405, %v404
    %v439 = vpack.c.b16 %v407, %v406
    %v488 = vunpack.c.l.b16 %v264
    %v489 = vunpack.c.l.b16 %v265
    %v490 = vunpack.c.l.b16 %v266
    %v491 = vunpack.c.l.b16 %v267
    %v492 = vunpack.c.l.b16 %v268
    %v493 = vunpack.c.l.b16 %v269
    %v494 = vunpack.c.l.b16 %v270
    %v495 = vunpack.c.l.b16 %v271
    %v496 = vunpack.c.l.b16 %v272
    %v497 = vunpack.c.l.b16 %v273
    %v498 = vunpack.c.l.b16 %v274
    %v499 = vunpack.c.l.b16 %v275
    %v500 = vunpack.c.l.b16 %v276
    %v501 = vunpack.c.l.b16 %v277
    %v502 = vunpack.c.l.b16 %v278
    %v503 = vunpack.c.l.b16 %v279
    %v504 = vpack.c.b16 %v489, %v488
    %v505 = vpack.c.b16 %v491, %v490
    %v506 = vpack.c.b16 %v493, %v492
    %v507 = vpack.c.b16 %v495, %v494
    %v508 = vpack.c.b16 %v497, %v496
    %v509 = vpack.c.b16 %v499, %v498
    %v510 = vpack.c.b16 %v501, %v500
    %v511 = vpack.c.b16 %v503, %v502
    %520 = vmatpush.bf16.msra.mxu0 %v511
    %521 = vmatpush.bf16.msra.mxu0 %v510
    %522 = vmatpush.bf16.msra.mxu0 %v509
    %523 = vmatpush.bf16.msra.mxu0 %v508
    %524 = vmatpush.bf16.msra.mxu0 %v507
    %525 = vmatpush.bf16.msra.mxu0 %v506
    %526 = vmatpush.bf16.msra.mxu0 %v505
    %527 = vmatpush.bf16.msra.mxu0 %v504
    %528 = vmatmul.bf16.gmra.mxu0 %v408
    %v529 = vpop.f32.mrf.mxu0
    %v530 = vadd.f32 0.0, %v529
    %v531 = vpop.f32.mrf.mxu0
    %v532 = vadd.f32 0.0, %v531
    %533 = vmatmul.bf16.gmra.mxu0 %v409
    %v534 = vpop.f32.mrf.mxu0
    %v535 = vadd.f32 0.0, %v534
    %v536 = vpop.f32.mrf.mxu0
    %v537 = vadd.f32 0.0, %v536
    %538 = vmatmul.bf16.gmra.mxu0 %v410
    %v539 = vpop.f32.mrf.mxu0
    %v540 = vadd.f32 0.0, %v539
    %v541 = vpop.f32.mrf.mxu0
    %v542 = vadd.f32 0.0, %v541
    %543 = vmatmul.bf16.gmra.mxu0 %v411
    %v544 = vpop.f32.mrf.mxu0
    %v545 = vadd.f32 0.0, %v544
    %v546 = vpop.f32.mrf.mxu0
    %v547 = vadd.f32 0.0, %v546
    %548 = vmatmul.bf16.gmra.mxu0 %v412
    %v549 = vpop.f32.mrf.mxu0
    %v550 = vadd.f32 0.0, %v549
    %v551 = vpop.f32.mrf.mxu0
    %v552 = vadd.f32 0.0, %v551
    %553 = vmatmul.bf16.gmra.mxu0 %v413
    %v554 = vpop.f32.mrf.mxu0
    %v555 = vadd.f32 0.0, %v554
    %v556 = vpop.f32.mrf.mxu0
    %v557 = vadd.f32 0.0, %v556
    %558 = vmatmul.bf16.gmra.mxu0 %v414
    %v559 = vpop.f32.mrf.mxu0
    %v560 = vadd.f32 0.0, %v559
    %v561 = vpop.f32.mrf.mxu0
    %v562 = vadd.f32 0.0, %v561
    %563 = vmatmul.bf16.gmra.mxu0 %v415
    %v564 = vpop.f32.mrf.mxu0
    %v565 = vadd.f32 0.0, %v564
    %v566 = vpop.f32.mrf.mxu0
    %v567 = vadd.f32 0.0, %v566
    %568 = vmatmul.bf16.gmra.mxu0 %v416
    %v569 = vpop.f32.mrf.mxu0
    %v570 = vadd.f32 0.0, %v569
    %v571 = vpop.f32.mrf.mxu0
    %v572 = vadd.f32 0.0, %v571
    %573 = vmatmul.bf16.gmra.mxu0 %v417
    %v574 = vpop.f32.mrf.mxu0
    %v575 = vadd.f32 0.0, %v574
    %v576 = vpop.f32.mrf.mxu0
    %v577 = vadd.f32 0.0, %v576
    %578 = vmatmul.bf16.gmra.mxu0 %v418
    %v579 = vpop.f32.mrf.mxu0
    %v580 = vadd.f32 0.0, %v579
    %v581 = vpop.f32.mrf.mxu0
    %v582 = vadd.f32 0.0, %v581
    %583 = vmatmul.bf16.gmra.mxu0 %v419
    %v584 = vpop.f32.mrf.mxu0
    %v585 = vadd.f32 0.0, %v584
    %v586 = vpop.f32.mrf.mxu0
    %v587 = vadd.f32 0.0, %v586
    %588 = vmatmul.bf16.gmra.mxu0 %v420
    %v589 = vpop.f32.mrf.mxu0
    %v590 = vadd.f32 0.0, %v589
    %v591 = vpop.f32.mrf.mxu0
    %v592 = vadd.f32 0.0, %v591
    %593 = vmatmul.bf16.gmra.mxu0 %v421
    %v594 = vpop.f32.mrf.mxu0
    %v595 = vadd.f32 0.0, %v594
    %v596 = vpop.f32.mrf.mxu0
    %v597 = vadd.f32 0.0, %v596
    %598 = vmatmul.bf16.gmra.mxu0 %v422
    %v599 = vpop.f32.mrf.mxu0
    %v600 = vadd.f32 0.0, %v599
    %v601 = vpop.f32.mrf.mxu0
    %v602 = vadd.f32 0.0, %v601
    %603 = vmatmul.bf16.gmra.mxu0 %v423
    %v604 = vpop.f32.mrf.mxu0
    %v605 = vadd.f32 0.0, %v604
    %v606 = vpop.f32.mrf.mxu0
    %v607 = vadd.f32 0.0, %v606
    %608 = vmatmul.bf16.gmra.mxu0 %v424
    %v609 = vpop.f32.mrf.mxu0
    %v610 = vadd.f32 0.0, %v609
    %v611 = vpop.f32.mrf.mxu0
    %v612 = vadd.f32 0.0, %v611
    %613 = vmatmul.bf16.gmra.mxu0 %v425
    %v614 = vpop.f32.mrf.mxu0
    %v615 = vadd.f32 0.0, %v614
    %v616 = vpop.f32.mrf.mxu0
    %v617 = vadd.f32 0.0, %v616
    %618 = vmatmul.bf16.gmra.mxu0 %v426
    %v619 = vpop.f32.mrf.mxu0
    %v620 = vadd.f32 0.0, %v619
    %v621 = vpop.f32.mrf.mxu0
    %v622 = vadd.f32 0.0, %v621
    %623 = vmatmul.bf16.gmra.mxu0 %v427
    %v624 = vpop.f32.mrf.mxu0
    %v625 = vadd.f32 0.0, %v624
    %v626 = vpop.f32.mrf.mxu0
    %v627 = vadd.f32 0.0, %v626
    %628 = vmatmul.bf16.gmra.mxu0 %v428
    %v629 = vpop.f32.mrf.mxu0
    %v630 = vadd.f32 0.0, %v629
    %v631 = vpop.f32.mrf.mxu0
    %v632 = vadd.f32 0.0, %v631
    %633 = vmatmul.bf16.gmra.mxu0 %v429
    %v634 = vpop.f32.mrf.mxu0
    %v635 = vadd.f32 0.0, %v634
    %v636 = vpop.f32.mrf.mxu0
    %v637 = vadd.f32 0.0, %v636
    %638 = vmatmul.bf16.gmra.mxu0 %v430
    %v639 = vpop.f32.mrf.mxu0
    %v640 = vadd.f32 0.0, %v639
    %v641 = vpop.f32.mrf.mxu0
    %v642 = vadd.f32 0.0, %v641
    %643 = vmatmul.bf16.gmra.mxu0 %v431
    %v644 = vpop.f32.mrf.mxu0
    %v645 = vadd.f32 0.0, %v644
    %v646 = vpop.f32.mrf.mxu0
    %v647 = vadd.f32 0.0, %v646
    %648 = vmatmul.bf16.gmra.mxu0 %v432
    %v649 = vpop.f32.mrf.mxu0
    %v650 = vadd.f32 0.0, %v649
    %v651 = vpop.f32.mrf.mxu0
    %v652 = vadd.f32 0.0, %v651
    %653 = vmatmul.bf16.gmra.mxu0 %v433
    %v654 = vpop.f32.mrf.mxu0
    %v655 = vadd.f32 0.0, %v654
    %v656 = vpop.f32.mrf.mxu0
    %v657 = vadd.f32 0.0, %v656
    %658 = vmatmul.bf16.gmra.mxu0 %v434
    %v659 = vpop.f32.mrf.mxu0
    %v660 = vadd.f32 0.0, %v659
    %v661 = vpop.f32.mrf.mxu0
    %v662 = vadd.f32 0.0, %v661
    %663 = vmatmul.bf16.gmra.mxu0 %v435
    %v664 = vpop.f32.mrf.mxu0
    %v665 = vadd.f32 0.0, %v664
    %v666 = vpop.f32.mrf.mxu0
    %v667 = vadd.f32 0.0, %v666
    %668 = vmatmul.bf16.gmra.mxu0 %v436
    %v669 = vpop.f32.mrf.mxu0
    %v670 = vadd.f32 0.0, %v669
    %v671 = vpop.f32.mrf.mxu0
    %v672 = vadd.f32 0.0, %v671
    %673 = vmatmul.bf16.gmra.mxu0 %v437
    %v674 = vpop.f32.mrf.mxu0
    %v675 = vadd.f32 0.0, %v674
    %v676 = vpop.f32.mrf.mxu0
    %v677 = vadd.f32 0.0, %v676
    %678 = vmatmul.bf16.gmra.mxu0 %v438
    %v679 = vpop.f32.mrf.mxu0
    %v680 = vadd.f32 0.0, %v679
    %v681 = vpop.f32.mrf.mxu0
    %v682 = vadd.f32 0.0, %v681
    %683 = vmatmul.bf16.gmra.mxu0 %v439
    %v684 = vpop.f32.mrf.mxu0
    %v685 = vadd.f32 0.0, %v684
    %v686 = vpop.f32.mrf.mxu0
    %v687 = vadd.f32 0.0, %v686
    %688 = vdwg.mxu0
    %v689 = vadd.f32 %v136, %v530
    %v690 = vadd.f32 %v137, %v532
    %v691 = vadd.f32 %v138, %v535
    %v692 = vadd.f32 %v139, %v537
    %v693 = vadd.f32 %v140, %v540
    %v694 = vadd.f32 %v141, %v542
    %v695 = vadd.f32 %v142, %v545
    %v696 = vadd.f32 %v143, %v547
    %v697 = vadd.f32 %v144, %v550
    %v698 = vadd.f32 %v145, %v552
    %v699 = vadd.f32 %v146, %v555
    %v700 = vadd.f32 %v147, %v557
    %v701 = vadd.f32 %v148, %v560
    %v702 = vadd.f32 %v149, %v562
    %v703 = vadd.f32 %v150, %v565
    %v704 = vadd.f32 %v151, %v567
    %v705 = vadd.f32 %v152, %v570
    %v706 = vadd.f32 %v153, %v572
    %v707 = vadd.f32 %v154, %v575
    %v708 = vadd.f32 %v155, %v577
    %v709 = vadd.f32 %v156, %v580
    %v710 = vadd.f32 %v157, %v582
    %v711 = vadd.f32 %v158, %v585
    %v712 = vadd.f32 %v159, %v587
    %v713 = vadd.f32 %v160, %v590
    %v714 = vadd.f32 %v161, %v592
    %v715 = vadd.f32 %v162, %v595
    %v716 = vadd.f32 %v163, %v597
    %v717 = vadd.f32 %v164, %v600
    %v718 = vadd.f32 %v165, %v602
    %v719 = vadd.f32 %v166, %v605
    %v720 = vadd.f32 %v167, %v607
    %v721 = vadd.f32 %v168, %v610
    %v722 = vadd.f32 %v169, %v612
    %v723 = vadd.f32 %v170, %v615
    %v724 = vadd.f32 %v171, %v617
    %v725 = vadd.f32 %v172, %v620
    %v726 = vadd.f32 %v173, %v622
    %v727 = vadd.f32 %v174, %v625
    %v728 = vadd.f32 %v175, %v627
    %v729 = vadd.f32 %v176, %v630
    %v730 = vadd.f32 %v177, %v632
    %v731 = vadd.f32 %v178, %v635
    %v732 = vadd.f32 %v179, %v637
    %v733 = vadd.f32 %v180, %v640
    %v734 = vadd.f32 %v181, %v642
    %v735 = vadd.f32 %v182, %v645
    %v736 = vadd.f32 %v183, %v647
    %v737 = vadd.f32 %v184, %v650
    %v738 = vadd.f32 %v185, %v652
    %v739 = vadd.f32 %v186, %v655
    %v740 = vadd.f32 %v187, %v657
    %v741 = vadd.f32 %v188, %v660
    %v742 = vadd.f32 %v189, %v662
    %v743 = vadd.f32 %v190, %v665
    %v744 = vadd.f32 %v191, %v667
    %v745 = vadd.f32 %v192, %v670
    %v746 = vadd.f32 %v193, %v672
    %v747 = vadd.f32 %v194, %v675
    %v748 = vadd.f32 %v195, %v677
    %v749 = vadd.f32 %v196, %v680
    %v750 = vadd.f32 %v197, %v682
    %v751 = vadd.f32 %v198, %v685
    %v752 = vadd.f32 %v199, %v687
    %753 = vst [vmem:[#allocation2] sm:$0xff] %v689
    %754 = vst [vmem:[#allocation2 + $0x8] sm:$0xff] %v690
    %755 = vst [vmem:[#allocation2 + $0x10] sm:$0xff] %v691
    %756 = vst [vmem:[#allocation2 + $0x18] sm:$0xff] %v692
    %757 = vst [vmem:[#allocation2 + $0x20] sm:$0xff] %v693
    %758 = vst [vmem:[#allocation2 + $0x28] sm:$0xff] %v694
    %759 = vst [vmem:[#allocation2 + $0x30] sm:$0xff] %v695
    %760 = vst [vmem:[#allocation2 + $0x38] sm:$0xff] %v696
    %761 = vst [vmem:[#allocation2 + $0x40] sm:$0xff] %v697
    %762 = vst [vmem:[#allocation2 + $0x48] sm:$0xff] %v698
    %763 = vst [vmem:[#allocation2 + $0x50] sm:$0xff] %v699
    %764 = vst [vmem:[#allocation2 + $0x58] sm:$0xff] %v700
    %765 = vst [vmem:[#allocation2 + $0x60] sm:$0xff] %v701
    %766 = vst [vmem:[#allocation2 + $0x68] sm:$0xff] %v702
    %767 = vst [vmem:[#allocation2 + $0x70] sm:$0xff] %v703
    %768 = vst [vmem:[#allocation2 + $0x78] sm:$0xff] %v704
    %769 = vst [vmem:[#allocation2 + $0x80] sm:$0xff] %v705
    %770 = vst [vmem:[#allocation2 + $0x88] sm:$0xff] %v706
    %771 = vst [vmem:[#allocation2 + $0x90] sm:$0xff] %v707
    %772 = vst [vmem:[#allocation2 + $0x98] sm:$0xff] %v708
    %773 = vst [vmem:[#allocation2 + $0xa0] sm:$0xff] %v709
    %774 = vst [vmem:[#allocation2 + $0xa8] sm:$0xff] %v710
    %775 = vst [vmem:[#allocation2 + $0xb0] sm:$0xff] %v711
    %776 = vst [vmem:[#allocation2 + $0xb8] sm:$0xff] %v712
    %777 = vst [vmem:[#allocation2 + $0xc0] sm:$0xff] %v713
    %778 = vst [vmem:[#allocation2 + $0xc8] sm:$0xff] %v714
    %779 = vst [vmem:[#allocation2 + $0xd0] sm:$0xff] %v715
    %780 = vst [vmem:[#allocation2 + $0xd8] sm:$0xff] %v716
    %781 = vst [vmem:[#allocation2 + $0xe0] sm:$0xff] %v717
    %782 = vst [vmem:[#allocation2 + $0xe8] sm:$0xff] %v718
    %783 = vst [vmem:[#allocation2 + $0xf0] sm:$0xff] %v719
    %784 = vst [vmem:[#allocation2 + $0xf8] sm:$0xff] %v720
    %785 = vst [vmem:[#allocation2 + $0x100] sm:$0xff] %v721
    %786 = vst [vmem:[#allocation2 + $0x108] sm:$0xff] %v722
    %787 = vst [vmem:[#allocation2 + $0x110] sm:$0xff] %v723
    %788 = vst [vmem:[#allocation2 + $0x118] sm:$0xff] %v724
    %789 = vst [vmem:[#allocation2 + $0x120] sm:$0xff] %v725
    %790 = vst [vmem:[#allocation2 + $0x128] sm:$0xff] %v726
    %791 = vst [vmem:[#allocation2 + $0x130] sm:$0xff] %v727
    %792 = vst [vmem:[#allocation2 + $0x138] sm:$0xff] %v728
    %793 = vst [vmem:[#allocation2 + $0x140] sm:$0xff] %v729
    %794 = vst [vmem:[#allocation2 + $0x148] sm:$0xff] %v730
    %795 = vst [vmem:[#allocation2 + $0x150] sm:$0xff] %v731
    %796 = vst [vmem:[#allocation2 + $0x158] sm:$0xff] %v732
    %797 = vst [vmem:[#allocation2 + $0x160] sm:$0xff] %v733
    %798 = vst [vmem:[#allocation2 + $0x168] sm:$0xff] %v734
    %799 = vst [vmem:[#allocation2 + $0x170] sm:$0xff] %v735
    %800 = vst [vmem:[#allocation2 + $0x178] sm:$0xff] %v736
    %801 = vst [vmem:[#allocation2 + $0x180] sm:$0xff] %v737
    %802 = vst [vmem:[#allocation2 + $0x188] sm:$0xff] %v738
    %803 = vst [vmem:[#allocation2 + $0x190] sm:$0xff] %v739
    %804 = vst [vmem:[#allocation2 + $0x198] sm:$0xff] %v740
    %805 = vst [vmem:[#allocation2 + $0x1a0] sm:$0xff] %v741
    %806 = vst [vmem:[#allocation2 + $0x1a8] sm:$0xff] %v742
    %807 = vst [vmem:[#allocation2 + $0x1b0] sm:$0xff] %v743
    %808 = vst [vmem:[#allocation2 + $0x1b8] sm:$0xff] %v744
    %809 = vst [vmem:[#allocation2 + $0x1c0] sm:$0xff] %v745
    %810 = vst [vmem:[#allocation2 + $0x1c8] sm:$0xff] %v746
    %811 = vst [vmem:[#allocation2 + $0x1d0] sm:$0xff] %v747
    %812 = vst [vmem:[#allocation2 + $0x1d8] sm:$0xff] %v748
    %813 = vst [vmem:[#allocation2 + $0x1e0] sm:$0xff] %v749
    %814 = vst [vmem:[#allocation2 + $0x1e8] sm:$0xff] %v750
    %815 = vst [vmem:[#allocation2 + $0x1f0] sm:$0xff] %v751
    %816 = vst [vmem:[#allocation2 + $0x1f8] sm:$0xff] %v752
    // Predicated region
    $region38: #{tpu_custom_call.1} parent=1 // pred_check
      %p817 = pneg %p68
    $region39: #{tpu_custom_call.1} parent=1 // pred_check_branch
      %819 = sbr.rel (%p817) target = $region41
    $region40: #{tpu_custom_call.1} parent=1 // pred_region
      %v820 = vld [vmem:[#allocation2] sm:$0xff]
      %v821 = vld [vmem:[#allocation2 + $0x8] sm:$0xff]
      %v822 = vld [vmem:[#allocation2 + $0x10] sm:$0xff]
      %v823 = vld [vmem:[#allocation2 + $0x18] sm:$0xff]
      %v824 = vld [vmem:[#allocation2 + $0x20] sm:$0xff]
      %v825 = vld [vmem:[#allocation2 + $0x28] sm:$0xff]
      %v826 = vld [vmem:[#allocation2 + $0x30] sm:$0xff]
      %v827 = vld [vmem:[#allocation2 + $0x38] sm:$0xff]
      %v828 = vld [vmem:[#allocation2 + $0x40] sm:$0xff]
      %v829 = vld [vmem:[#allocation2 + $0x48] sm:$0xff]
      %v830 = vld [vmem:[#allocation2 + $0x50] sm:$0xff]
      %v831 = vld [vmem:[#allocation2 + $0x58] sm:$0xff]
      %v832 = vld [vmem:[#allocation2 + $0x60] sm:$0xff]
      %v833 = vld [vmem:[#allocation2 + $0x68] sm:$0xff]
      %v834 = vld [vmem:[#allocation2 + $0x70] sm:$0xff]
      %v835 = vld [vmem:[#allocation2 + $0x78] sm:$0xff]
      %v836 = vld [vmem:[#allocation2 + $0x80] sm:$0xff]
      %v837 = vld [vmem:[#allocation2 + $0x88] sm:$0xff]
      %v838 = vld [vmem:[#allocation2 + $0x90] sm:$0xff]
      %v839 = vld [vmem:[#allocation2 + $0x98] sm:$0xff]
      %v840 = vld [vmem:[#allocation2 + $0xa0] sm:$0xff]
      %v841 = vld [vmem:[#allocation2 + $0xa8] sm:$0xff]
      %v842 = vld [vmem:[#allocation2 + $0xb0] sm:$0xff]
      %v843 = vld [vmem:[#allocation2 + $0xb8] sm:$0xff]
      %v844 = vld [vmem:[#allocation2 + $0xc0] sm:$0xff]
      %v845 = vld [vmem:[#allocation2 + $0xc8] sm:$0xff]
      %v846 = vld [vmem:[#allocation2 + $0xd0] sm:$0xff]
      %v847 = vld [vmem:[#allocation2 + $0xd8] sm:$0xff]
      %v848 = vld [vmem:[#allocation2 + $0xe0] sm:$0xff]
      %v849 = vld [vmem:[#allocation2 + $0xe8] sm:$0xff]
      %v850 = vld [vmem:[#allocation2 + $0xf0] sm:$0xff]
      %v851 = vld [vmem:[#allocation2 + $0xf8] sm:$0xff]
      %v852 = vld [vmem:[#allocation2 + $0x100] sm:$0xff]
      %v853 = vld [vmem:[#allocation2 + $0x108] sm:$0xff]
      %v854 = vld [vmem:[#allocation2 + $0x110] sm:$0xff]
      %v855 = vld [vmem:[#allocation2 + $0x118] sm:$0xff]
      %v856 = vld [vmem:[#allocation2 + $0x120] sm:$0xff]
      %v857 = vld [vmem:[#allocation2 + $0x128] sm:$0xff]
      %v858 = vld [vmem:[#allocation2 + $0x130] sm:$0xff]
      %v859 = vld [vmem:[#allocation2 + $0x138] sm:$0xff]
      %v860 = vld [vmem:[#allocation2 + $0x140] sm:$0xff]
      %v861 = vld [vmem:[#allocation2 + $0x148] sm:$0xff]
      %v862 = vld [vmem:[#allocation2 + $0x150] sm:$0xff]
      %v863 = vld [vmem:[#allocation2 + $0x158] sm:$0xff]
      %v864 = vld [vmem:[#allocation2 + $0x160] sm:$0xff]
      %v865 = vld [vmem:[#allocation2 + $0x168] sm:$0xff]
      %v866 = vld [vmem:[#allocation2 + $0x170] sm:$0xff]
      %v867 = vld [vmem:[#allocation2 + $0x178] sm:$0xff]
      %v868 = vld [vmem:[#allocation2 + $0x180] sm:$0xff]
      %v869 = vld [vmem:[#allocation2 + $0x188] sm:$0xff]
      %v870 = vld [vmem:[#allocation2 + $0x190] sm:$0xff]
      %v871 = vld [vmem:[#allocation2 + $0x198] sm:$0xff]
      %v872 = vld [vmem:[#allocation2 + $0x1a0] sm:$0xff]
      %v873 = vld [vmem:[#allocation2 + $0x1a8] sm:$0xff]
      %v874 = vld [vmem:[#allocation2 + $0x1b0] sm:$0xff]
      %v875 = vld [vmem:[#allocation2 + $0x1b8] sm:$0xff]
      %v876 = vld [vmem:[#allocation2 + $0x1c0] sm:$0xff]
      %v877 = vld [vmem:[#allocation2 + $0x1c8] sm:$0xff]
      %v878 = vld [vmem:[#allocation2 + $0x1d0] sm:$0xff]
      %v879 = vld [vmem:[#allocation2 + $0x1d8] sm:$0xff]
      %v880 = vld [vmem:[#allocation2 + $0x1e0] sm:$0xff]
      %v881 = vld [vmem:[#allocation2 + $0x1e8] sm:$0xff]
      %v882 = vld [vmem:[#allocation2 + $0x1f0] sm:$0xff]
      %v883 = vld [vmem:[#allocation2 + $0x1f8] sm:$0xff]
      %v884 = vld [vmem:[%s2] sm:$0x1]
      %v886 = vperm.slane %v884, 0
      %v888 = vmul.f32 %v820, %v886
      %v889 = vmul.f32 %v821, %v886
      %v890 = vmul.f32 %v822, %v886
      %v891 = vmul.f32 %v823, %v886
      %v892 = vmul.f32 %v824, %v886
      %v893 = vmul.f32 %v825, %v886
      %v894 = vmul.f32 %v826, %v886
      %v895 = vmul.f32 %v827, %v886
      %v896 = vmul.f32 %v828, %v886
      %v897 = vmul.f32 %v829, %v886
      %v898 = vmul.f32 %v830, %v886
      %v899 = vmul.f32 %v831, %v886
      %v900 = vmul.f32 %v832, %v886
      %v901 = vmul.f32 %v833, %v886
      %v902 = vmul.f32 %v834, %v886
      %v903 = vmul.f32 %v835, %v886
      %v904 = vmul.f32 %v836, %v886
      %v905 = vmul.f32 %v837, %v886
      %v906 = vmul.f32 %v838, %v886
      %v907 = vmul.f32 %v839, %v886
      %v908 = vmul.f32 %v840, %v886
      %v909 = vmul.f32 %v841, %v886
      %v910 = vmul.f32 %v842, %v886
      %v911 = vmul.f32 %v843, %v886
      %v912 = vmul.f32 %v844, %v886
      %v913 = vmul.f32 %v845, %v886
      %v914 = vmul.f32 %v846, %v886
      %v915 = vmul.f32 %v847, %v886
      %v916 = vmul.f32 %v848, %v886
      %v917 = vmul.f32 %v849, %v886
      %v918 = vmul.f32 %v850, %v886
      %v919 = vmul.f32 %v851, %v886
      %v920 = vmul.f32 %v852, %v886
      %v921 = vmul.f32 %v853, %v886
      %v922 = vmul.f32 %v854, %v886
      %v923 = vmul.f32 %v855, %v886
      %v924 = vmul.f32 %v856, %v886
      %v925 = vmul.f32 %v857, %v886
      %v926 = vmul.f32 %v858, %v886
      %v927 = vmul.f32 %v859, %v886
      %v928 = vmul.f32 %v860, %v886
      %v929 = vmul.f32 %v861, %v886
      %v930 = vmul.f32 %v862, %v886
      %v931 = vmul.f32 %v863, %v886
      %v932 = vmul.f32 %v864, %v886
      %v933 = vmul.f32 %v865, %v886
      %v934 = vmul.f32 %v866, %v886
      %v935 = vmul.f32 %v867, %v886
      %v936 = vmul.f32 %v868, %v886
      %v937 = vmul.f32 %v869, %v886
      %v938 = vmul.f32 %v870, %v886
      %v939 = vmul.f32 %v871, %v886
      %v940 = vmul.f32 %v872, %v886
      %v941 = vmul.f32 %v873, %v886
      %v942 = vmul.f32 %v874, %v886
      %v943 = vmul.f32 %v875, %v886
      %v944 = vmul.f32 %v876, %v886
      %v945 = vmul.f32 %v877, %v886
      %v946 = vmul.f32 %v878, %v886
      %v947 = vmul.f32 %v879, %v886
      %v948 = vmul.f32 %v880, %v886
      %v949 = vmul.f32 %v881, %v886
      %v950 = vmul.f32 %v882, %v886
      %v951 = vmul.f32 %v883, %v886
      %v952 = vld [vmem:[%s3] sm:$0x1]
      %v954 = vperm.slane %v952, 0
      %v956 = vadd.f32 %v888, %v954
      %v957 = vadd.f32 %v889, %v954
      %v958 = vadd.f32 %v890, %v954
      %v959 = vadd.f32 %v891, %v954
      %v960 = vadd.f32 %v892, %v954
      %v961 = vadd.f32 %v893, %v954
      %v962 = vadd.f32 %v894, %v954
      %v963 = vadd.f32 %v895, %v954
      %v964 = vadd.f32 %v896, %v954
      %v965 = vadd.f32 %v897, %v954
      %v966 = vadd.f32 %v898, %v954
      %v967 = vadd.f32 %v899, %v954
      %v968 = vadd.f32 %v900, %v954
      %v969 = vadd.f32 %v901, %v954
      %v970 = vadd.f32 %v902, %v954
      %v971 = vadd.f32 %v903, %v954
      %v972 = vadd.f32 %v904, %v954
      %v973 = vadd.f32 %v905, %v954
      %v974 = vadd.f32 %v906, %v954
      %v975 = vadd.f32 %v907, %v954
      %v976 = vadd.f32 %v908, %v954
      %v977 = vadd.f32 %v909, %v954
      %v978 = vadd.f32 %v910, %v954
      %v979 = vadd.f32 %v911, %v954
      %v980 = vadd.f32 %v912, %v954
      %v981 = vadd.f32 %v913, %v954
      %v982 = vadd.f32 %v914, %v954
      %v983 = vadd.f32 %v915, %v954
      %v984 = vadd.f32 %v916, %v954
      %v985 = vadd.f32 %v917, %v954
      %v986 = vadd.f32 %v918, %v954
      %v987 = vadd.f32 %v919, %v954
      %v988 = vadd.f32 %v920, %v954
      %v989 = vadd.f32 %v921, %v954
      %v990 = vadd.f32 %v922, %v954
      %v991 = vadd.f32 %v923, %v954
      %v992 = vadd.f32 %v924, %v954
      %v993 = vadd.f32 %v925, %v954
      %v994 = vadd.f32 %v926, %v954
      %v995 = vadd.f32 %v927, %v954
      %v996 = vadd.f32 %v928, %v954
      %v997 = vadd.f32 %v929, %v954
      %v998 = vadd.f32 %v930, %v954
      %v999 = vadd.f32 %v931, %v954
      %v1000 = vadd.f32 %v932, %v954
      %v1001 = vadd.f32 %v933, %v954
      %v1002 = vadd.f32 %v934, %v954
      %v1003 = vadd.f32 %v935, %v954
      %v1004 = vadd.f32 %v936, %v954
      %v1005 = vadd.f32 %v937, %v954
      %v1006 = vadd.f32 %v938, %v954
      %v1007 = vadd.f32 %v939, %v954
      %v1008 = vadd.f32 %v940, %v954
      %v1009 = vadd.f32 %v941, %v954
      %v1010 = vadd.f32 %v942, %v954
      %v1011 = vadd.f32 %v943, %v954
      %v1012 = vadd.f32 %v944, %v954
      %v1013 = vadd.f32 %v945, %v954
      %v1014 = vadd.f32 %v946, %v954
      %v1015 = vadd.f32 %v947, %v954
      %v1016 = vadd.f32 %v948, %v954
      %v1017 = vadd.f32 %v949, %v954
      %v1018 = vadd.f32 %v950, %v954
      %v1019 = vadd.f32 %v951, %v954
      %v1020 = vld [vmem:[#allocation8] sm:$0xff]
      %v1021 = vld [vmem:[#allocation8 + $0x8] sm:$0xff]
      %v1022 = vld [vmem:[#allocation8 + $0x10] sm:$0xff]
      %v1023 = vld [vmem:[#allocation8 + $0x18] sm:$0xff]
      %v1024 = vld [vmem:[#allocation8 + $0x20] sm:$0xff]
      %v1025 = vld [vmem:[#allocation8 + $0x28] sm:$0xff]
      %v1026 = vld [vmem:[#allocation8 + $0x30] sm:$0xff]
      %v1027 = vld [vmem:[#allocation8 + $0x38] sm:$0xff]
      %v1028 = vld [vmem:[#allocation8 + $0x40] sm:$0xff]
      %v1029 = vld [vmem:[#allocation8 + $0x48] sm:$0xff]
      %v1030 = vld [vmem:[#allocation8 + $0x50] sm:$0xff]
      %v1031 = vld [vmem:[#allocation8 + $0x58] sm:$0xff]
      %v1032 = vld [vmem:[#allocation8 + $0x60] sm:$0xff]
      %v1033 = vld [vmem:[#allocation8 + $0x68] sm:$0xff]
      %v1034 = vld [vmem:[#allocation8 + $0x70] sm:$0xff]
      %v1035 = vld [vmem:[#allocation8 + $0x78] sm:$0xff]
      %v1036 = vld [vmem:[#allocation8 + $0x80] sm:$0xff]
      %v1037 = vld [vmem:[#allocation8 + $0x88] sm:$0xff]
      %v1038 = vld [vmem:[#allocation8 + $0x90] sm:$0xff]
      %v1039 = vld [vmem:[#allocation8 + $0x98] sm:$0xff]
      %v1040 = vld [vmem:[#allocation8 + $0xa0] sm:$0xff]
      %v1041 = vld [vmem:[#allocation8 + $0xa8] sm:$0xff]
      %v1042 = vld [vmem:[#allocation8 + $0xb0] sm:$0xff]
      %v1043 = vld [vmem:[#allocation8 + $0xb8] sm:$0xff]
      %v1044 = vld [vmem:[#allocation8 + $0xc0] sm:$0xff]
      %v1045 = vld [vmem:[#allocation8 + $0xc8] sm:$0xff]
      %v1046 = vld [vmem:[#allocation8 + $0xd0] sm:$0xff]
      %v1047 = vld [vmem:[#allocation8 + $0xd8] sm:$0xff]
      %v1048 = vld [vmem:[#allocation8 + $0xe0] sm:$0xff]
      %v1049 = vld [vmem:[#allocation8 + $0xe8] sm:$0xff]
      %v1050 = vld [vmem:[#allocation8 + $0xf0] sm:$0xff]
      %v1051 = vld [vmem:[#allocation8 + $0xf8] sm:$0xff]
      %v1052 = vld [vmem:[#allocation8 + $0x100] sm:$0xff]
      %v1053 = vld [vmem:[#allocation8 + $0x108] sm:$0xff]
      %v1054 = vld [vmem:[#allocation8 + $0x110] sm:$0xff]
      %v1055 = vld [vmem:[#allocation8 + $0x118] sm:$0xff]
      %v1056 = vld [vmem:[#allocation8 + $0x120] sm:$0xff]
      %v1057 = vld [vmem:[#allocation8 + $0x128] sm:$0xff]
      %v1058 = vld [vmem:[#allocation8 + $0x130] sm:$0xff]
      %v1059 = vld [vmem:[#allocation8 + $0x138] sm:$0xff]
      %v1060 = vld [vmem:[#allocation8 + $0x140] sm:$0xff]
      %v1061 = vld [vmem:[#allocation8 + $0x148] sm:$0xff]
      %v1062 = vld [vmem:[#allocation8 + $0x150] sm:$0xff]
      %v1063 = vld [vmem:[#allocation8 + $0x158] sm:$0xff]
      %v1064 = vld [vmem:[#allocation8 + $0x160] sm:$0xff]
      %v1065 = vld [vmem:[#allocation8 + $0x168] sm:$0xff]
      %v1066 = vld [vmem:[#allocation8 + $0x170] sm:$0xff]
      %v1067 = vld [vmem:[#allocation8 + $0x178] sm:$0xff]
      %v1068 = vld [vmem:[#allocation8 + $0x180] sm:$0xff]
      %v1069 = vld [vmem:[#allocation8 + $0x188] sm:$0xff]
      %v1070 = vld [vmem:[#allocation8 + $0x190] sm:$0xff]
      %v1071 = vld [vmem:[#allocation8 + $0x198] sm:$0xff]
      %v1072 = vld [vmem:[#allocation8 + $0x1a0] sm:$0xff]
      %v1073 = vld [vmem:[#allocation8 + $0x1a8] sm:$0xff]
      %v1074 = vld [vmem:[#allocation8 + $0x1b0] sm:$0xff]
      %v1075 = vld [vmem:[#allocation8 + $0x1b8] sm:$0xff]
      %v1076 = vld [vmem:[#allocation8 + $0x1c0] sm:$0xff]
      %v1077 = vld [vmem:[#allocation8 + $0x1c8] sm:$0xff]
      %v1078 = vld [vmem:[#allocation8 + $0x1d0] sm:$0xff]
      %v1079 = vld [vmem:[#allocation8 + $0x1d8] sm:$0xff]
      %v1080 = vld [vmem:[#allocation8 + $0x1e0] sm:$0xff]
      %v1081 = vld [vmem:[#allocation8 + $0x1e8] sm:$0xff]
      %v1082 = vld [vmem:[#allocation8 + $0x1f0] sm:$0xff]
      %v1083 = vld [vmem:[#allocation8 + $0x1f8] sm:$0xff]
      %v1084 = vadd.f32 %v956, %v1020
      %v1085 = vadd.f32 %v957, %v1021
      %v1086 = vadd.f32 %v958, %v1022
      %v1087 = vadd.f32 %v959, %v1023
      %v1088 = vadd.f32 %v960, %v1024
      %v1089 = vadd.f32 %v961, %v1025
      %v1090 = vadd.f32 %v962, %v1026
      %v1091 = vadd.f32 %v963, %v1027
      %v1092 = vadd.f32 %v964, %v1028
      %v1093 = vadd.f32 %v965, %v1029
      %v1094 = vadd.f32 %v966, %v1030
      %v1095 = vadd.f32 %v967, %v1031
      %v1096 = vadd.f32 %v968, %v1032
      %v1097 = vadd.f32 %v969, %v1033
      %v1098 = vadd.f32 %v970, %v1034
      %v1099 = vadd.f32 %v971, %v1035
      %v1100 = vadd.f32 %v972, %v1036
      %v1101 = vadd.f32 %v973, %v1037
      %v1102 = vadd.f32 %v974, %v1038
      %v1103 = vadd.f32 %v975, %v1039
      %v1104 = vadd.f32 %v976, %v1040
      %v1105 = vadd.f32 %v977, %v1041
      %v1106 = vadd.f32 %v978, %v1042
      %v1107 = vadd.f32 %v979, %v1043
      %v1108 = vadd.f32 %v980, %v1044
      %v1109 = vadd.f32 %v981, %v1045
      %v1110 = vadd.f32 %v982, %v1046
      %v1111 = vadd.f32 %v983, %v1047
      %v1112 = vadd.f32 %v984, %v1048
      %v1113 = vadd.f32 %v985, %v1049
      %v1114 = vadd.f32 %v986, %v1050
      %v1115 = vadd.f32 %v987, %v1051
      %v1116 = vadd.f32 %v988, %v1052
      %v1117 = vadd.f32 %v989, %v1053
      %v1118 = vadd.f32 %v990, %v1054
      %v1119 = vadd.f32 %v991, %v1055
      %v1120 = vadd.f32 %v992, %v1056
      %v1121 = vadd.f32 %v993, %v1057
      %v1122 = vadd.f32 %v994, %v1058
      %v1123 = vadd.f32 %v995, %v1059
      %v1124 = vadd.f32 %v996, %v1060
      %v1125 = vadd.f32 %v997, %v1061
      %v1126 = vadd.f32 %v998, %v1062
      %v1127 = vadd.f32 %v999, %v1063
      %v1128 = vadd.f32 %v1000, %v1064
      %v1129 = vadd.f32 %v1001, %v1065
      %v1130 = vadd.f32 %v1002, %v1066
      %v1131 = vadd.f32 %v1003, %v1067
      %v1132 = vadd.f32 %v1004, %v1068
      %v1133 = vadd.f32 %v1005, %v1069
      %v1134 = vadd.f32 %v1006, %v1070
      %v1135 = vadd.f32 %v1007, %v1071
      %v1136 = vadd.f32 %v1008, %v1072
      %v1137 = vadd.f32 %v1009, %v1073
      %v1138 = vadd.f32 %v1010, %v1074
      %v1139 = vadd.f32 %v1011, %v1075
      %v1140 = vadd.f32 %v1012, %v1076
      %v1141 = vadd.f32 %v1013, %v1077
      %v1142 = vadd.f32 %v1014, %v1078
      %v1143 = vadd.f32 %v1015, %v1079
      %v1144 = vadd.f32 %v1016, %v1080
      %v1145 = vadd.f32 %v1017, %v1081
      %v1146 = vadd.f32 %v1018, %v1082
      %v1147 = vadd.f32 %v1019, %v1083
      %v1148 = vmax.f32 %v1084, 0.0
      %v1149 = vmax.f32 %v1085, 0.0
      %v1150 = vmax.f32 %v1086, 0.0
      %v1151 = vmax.f32 %v1087, 0.0
      %v1152 = vmax.f32 %v1088, 0.0
      %v1153 = vmax.f32 %v1089, 0.0
      %v1154 = vmax.f32 %v1090, 0.0
      %v1155 = vmax.f32 %v1091, 0.0
      %v1156 = vmax.f32 %v1092, 0.0
      %v1157 = vmax.f32 %v1093, 0.0
      %v1158 = vmax.f32 %v1094, 0.0
      %v1159 = vmax.f32 %v1095, 0.0
      %v1160 = vmax.f32 %v1096, 0.0
      %v1161 = vmax.f32 %v1097, 0.0
      %v1162 = vmax.f32 %v1098, 0.0
      %v1163 = vmax.f32 %v1099, 0.0
      %v1164 = vmax.f32 %v1100, 0.0
      %v1165 = vmax.f32 %v1101, 0.0
      %v1166 = vmax.f32 %v1102, 0.0
      %v1167 = vmax.f32 %v1103, 0.0
      %v1168 = vmax.f32 %v1104, 0.0
      %v1169 = vmax.f32 %v1105, 0.0
      %v1170 = vmax.f32 %v1106, 0.0
      %v1171 = vmax.f32 %v1107, 0.0
      %v1172 = vmax.f32 %v1108, 0.0
      %v1173 = vmax.f32 %v1109, 0.0
      %v1174 = vmax.f32 %v1110, 0.0
      %v1175 = vmax.f32 %v1111, 0.0
      %v1176 = vmax.f32 %v1112, 0.0
      %v1177 = vmax.f32 %v1113, 0.0
      %v1178 = vmax.f32 %v1114, 0.0
      %v1179 = vmax.f32 %v1115, 0.0
      %v1180 = vmax.f32 %v1116, 0.0
      %v1181 = vmax.f32 %v1117, 0.0
      %v1182 = vmax.f32 %v1118, 0.0
      %v1183 = vmax.f32 %v1119, 0.0
      %v1184 = vmax.f32 %v1120, 0.0
      %v1185 = vmax.f32 %v1121, 0.0
      %v1186 = vmax.f32 %v1122, 0.0
      %v1187 = vmax.f32 %v1123, 0.0
      %v1188 = vmax.f32 %v1124, 0.0
      %v1189 = vmax.f32 %v1125, 0.0
      %v1190 = vmax.f32 %v1126, 0.0
      %v1191 = vmax.f32 %v1127, 0.0
      %v1192 = vmax.f32 %v1128, 0.0
      %v1193 = vmax.f32 %v1129, 0.0
      %v1194 = vmax.f32 %v1130, 0.0
      %v1195 = vmax.f32 %v1131, 0.0
      %v1196 = vmax.f32 %v1132, 0.0
      %v1197 = vmax.f32 %v1133, 0.0
      %v1198 = vmax.f32 %v1134, 0.0
      %v1199 = vmax.f32 %v1135, 0.0
      %v1200 = vmax.f32 %v1136, 0.0
      %v1201 = vmax.f32 %v1137, 0.0
      %v1202 = vmax.f32 %v1138, 0.0
      %v1203 = vmax.f32 %v1139, 0.0
      %v1204 = vmax.f32 %v1140, 0.0
      %v1205 = vmax.f32 %v1141, 0.0
      %v1206 = vmax.f32 %v1142, 0.0
      %v1207 = vmax.f32 %v1143, 0.0
      %v1208 = vmax.f32 %v1144, 0.0
      %v1209 = vmax.f32 %v1145, 0.0
      %v1210 = vmax.f32 %v1146, 0.0
      %v1211 = vmax.f32 %v1147, 0.0
      %1212 = vst [vmem:[#allocation9] sm:$0xff] %v1148
      %1213 = vst [vmem:[#allocation9 + $0x8] sm:$0xff] %v1149
      %1214 = vst [vmem:[#allocation9 + $0x10] sm:$0xff] %v1150
      %1215 = vst [vmem:[#allocation9 + $0x18] sm:$0xff] %v1151
      %1216 = vst [vmem:[#allocation9 + $0x20] sm:$0xff] %v1152
      %1217 = vst [vmem:[#allocation9 + $0x28] sm:$0xff] %v1153
      %1218 = vst [vmem:[#allocation9 + $0x30] sm:$0xff] %v1154
      %1219 = vst [vmem:[#allocation9 + $0x38] sm:$0xff] %v1155
      %1220 = vst [vmem:[#allocation9 + $0x40] sm:$0xff] %v1156
      %1221 = vst [vmem:[#allocation9 + $0x48] sm:$0xff] %v1157
      %1222 = vst [vmem:[#allocation9 + $0x50] sm:$0xff] %v1158
      %1223 = vst [vmem:[#allocation9 + $0x58] sm:$0xff] %v1159
      %1224 = vst [vmem:[#allocation9 + $0x60] sm:$0xff] %v1160
      %1225 = vst [vmem:[#allocation9 + $0x68] sm:$0xff] %v1161
      %1226 = vst [vmem:[#allocation9 + $0x70] sm:$0xff] %v1162
      %1227 = vst [vmem:[#allocation9 + $0x78] sm:$0xff] %v1163
      %1228 = vst [vmem:[#allocation9 + $0x80] sm:$0xff] %v1164
      %1229 = vst [vmem:[#allocation9 + $0x88] sm:$0xff] %v1165
      %1230 = vst [vmem:[#allocation9 + $0x90] sm:$0xff] %v1166
      %1231 = vst [vmem:[#allocation9 + $0x98] sm:$0xff] %v1167
      %1232 = vst [vmem:[#allocation9 + $0xa0] sm:$0xff] %v1168
      %1233 = vst [vmem:[#allocation9 + $0xa8] sm:$0xff] %v1169
      %1234 = vst [vmem:[#allocation9 + $0xb0] sm:$0xff] %v1170
      %1235 = vst [vmem:[#allocation9 + $0xb8] sm:$0xff] %v1171
      %1236 = vst [vmem:[#allocation9 + $0xc0] sm:$0xff] %v1172
      %1237 = vst [vmem:[#allocation9 + $0xc8] sm:$0xff] %v1173
      %1238 = vst [vmem:[#allocation9 + $0xd0] sm:$0xff] %v1174
      %1239 = vst [vmem:[#allocation9 + $0xd8] sm:$0xff] %v1175
      %1240 = vst [vmem:[#allocation9 + $0xe0] sm:$0xff] %v1176
      %1241 = vst [vmem:[#allocation9 + $0xe8] sm:$0xff] %v1177
      %1242 = vst [vmem:[#allocation9 + $0xf0] sm:$0xff] %v1178
      %1243 = vst [vmem:[#allocation9 + $0xf8] sm:$0xff] %v1179
      %1244 = vst [vmem:[#allocation9 + $0x100] sm:$0xff] %v1180
      %1245 = vst [vmem:[#allocation9 + $0x108] sm:$0xff] %v1181
      %1246 = vst [vmem:[#allocation9 + $0x110] sm:$0xff] %v1182
      %1247 = vst [vmem:[#allocation9 + $0x118] sm:$0xff] %v1183
      %1248 = vst [vmem:[#allocation9 + $0x120] sm:$0xff] %v1184
      %1249 = vst [vmem:[#allocation9 + $0x128] sm:$0xff] %v1185
      %1250 = vst [vmem:[#allocation9 + $0x130] sm:$0xff] %v1186
      %1251 = vst [vmem:[#allocation9 + $0x138] sm:$0xff] %v1187
      %1252 = vst [vmem:[#allocation9 + $0x140] sm:$0xff] %v1188
      %1253 = vst [vmem:[#allocation9 + $0x148] sm:$0xff] %v1189
      %1254 = vst [vmem:[#allocation9 + $0x150] sm:$0xff] %v1190
      %1255 = vst [vmem:[#allocation9 + $0x158] sm:$0xff] %v1191
      %1256 = vst [vmem:[#allocation9 + $0x160] sm:$0xff] %v1192
      %1257 = vst [vmem:[#allocation9 + $0x168] sm:$0xff] %v1193
      %1258 = vst [vmem:[#allocation9 + $0x170] sm:$0xff] %v1194
      %1259 = vst [vmem:[#allocation9 + $0x178] sm:$0xff] %v1195
      %1260 = vst [vmem:[#allocation9 + $0x180] sm:$0xff] %v1196
      %1261 = vst [vmem:[#allocation9 + $0x188] sm:$0xff] %v1197
      %1262 = vst [vmem:[#allocation9 + $0x190] sm:$0xff] %v1198
      %1263 = vst [vmem:[#allocation9 + $0x198] sm:$0xff] %v1199
      %1264 = vst [vmem:[#allocation9 + $0x1a0] sm:$0xff] %v1200
      %1265 = vst [vmem:[#allocation9 + $0x1a8] sm:$0xff] %v1201
      %1266 = vst [vmem:[#allocation9 + $0x1b0] sm:$0xff] %v1202
      %1267 = vst [vmem:[#allocation9 + $0x1b8] sm:$0xff] %v1203
      %1268 = vst [vmem:[#allocation9 + $0x1c0] sm:$0xff] %v1204
      %1269 = vst [vmem:[#allocation9 + $0x1c8] sm:$0xff] %v1205
      %1270 = vst [vmem:[#allocation9 + $0x1d0] sm:$0xff] %v1206
      %1271 = vst [vmem:[#allocation9 + $0x1d8] sm:$0xff] %v1207
      %1272 = vst [vmem:[#allocation9 + $0x1e0] sm:$0xff] %v1208
      %1273 = vst [vmem:[#allocation9 + $0x1e8] sm:$0xff] %v1209
      %1274 = vst [vmem:[#allocation9 + $0x1f0] sm:$0xff] %v1210
      %1275 = vst [vmem:[#allocation9 + $0x1f8] sm:$0xff] %v1211
    $region41: #{tpu_custom_call.1} parent=1 // pred_fallthru
      _
    // Predicated region
    $region42: #{tpu_custom_call.1} parent=1 // pred_check
      _
    $region43: #{tpu_custom_call.1} parent=1 // pred_check_branch
      %1277 = sbr.rel (0) target = $region45
    $region44: #{tpu_custom_call.1} parent=1 // pred_region
      %1279 = vsyncadd [#allocation5], 0
      %s1280 = sshll.u32 [#allocation9], 4
      %s1281 = int_to_ptr.vmem [resolvable:$true] %s1280
      %s1282 = sshll.u32 %s5, 4
      %s1283 = int_to_ptr.hbm [resolvable:$true] %s1282
      %1288 = dma.vmem_to_hbm [thread:$0]  %s1281, 8192, %s1283, [#allocation5], 128, 128, 8
    $region45: #{tpu_custom_call.1} parent=1 // pred_fallthru
      _
    // Predicated region
    $region46: #{tpu_custom_call.1} parent=1 // pred_check
      _
    $region47: #{tpu_custom_call.1} parent=1 // pred_check_branch
      %1290 = sbr.rel (0) target = $region49
    $region48: #{tpu_custom_call.1} parent=1 // pred_region
      %1292 = dma.done [#allocation5], 8192
    $region49: #{tpu_custom_call.1} parent=1 // pred_fallthru
      _
    %1293 = vsyncpa [#allocation4], 1
    %1294 = vsyncpa [#allocation7], 1
    %1295 = vsyncpa [#allocation5], 1

</llo_original>
